<compile_context>
chip_gen: v7x
topology: tpu7x:2x2x1
jax: 0.10.0
libtpu: 0.0.40
codegen_flags: <defaults>
</compile_context>

<pallas_src>
import functools

import numpy as np
import jax
import jax.numpy as jnp
from jax.experimental import pallas as pl
from jax.experimental.pallas import tpu as pltpu

_LANE = 128           # minimum batch tile (one vreg lane width)
_MAX_LANE_TILE = 512  # cap on the per-grid-step batch tile (multiple of 128)


def _vpu_matmul(mat, x):
    """(R, C) constant @ (C, B) batch, done on the VPU.

    C <= 12 here, so an unrolled broadcast-multiply-accumulate keeps full f32
    precision and avoids MXU push / result-FIFO drain latency for a tiny
    contraction. `mat` and `x` are in-register values; shapes are static.
    """
    acc = None
    for c in range(mat.shape[1]):
        term = mat[:, c:c + 1] * x[c:c + 1, :]          # (R,1)*(1,B) -> (R,B)
        acc = term if acc is None else acc + term
    return acc


def _kuramoto_kernel(slab_ref, x_ref, out_ref, *, n_nodes):
    n = n_nodes
    x = x_ref[...]                     # one full-tile load (4N, B)
    x1 = x[0:n, :]                     # (N,  B) angles
    x2 = x[n:2 * n, :]                 # (N,  B) angular velocities
    xi = x[2 * n:4 * n, :]             # (2N, B) controller state

    # Unpack the packed constant slab (row offsets fixed in make_kuramoto_params).
    slab = slab_ref[...]
    kblk = slab[0:2 * n, 0:2 * n]             # (2N, 2N) block-diag K
    w_m = slab[2 * n:5 * n, 0:2 * n]          # (3N, 2N) fused map, m part
    w_x2 = slab[2 * n:5 * n, 2 * n:3 * n]     # (3N, N)  fused map, x2 part
    adjT = slab[5 * n:6 * n, 0:n]             # (N, N)   adj transposed
    bvec = slab[6 * n:8 * n, 0:1]             # (2N, 1)

    # Controller nonlinearity: m = tanh(K_blk @ xi + b)        (EUP tanh)
    m = jnp.tanh(_vpu_matmul(kblk, xi) + bvec)                    # (2N, B)

    # Fused linear map (precomputed on host):
    #   [ (coupling/N) * u ; F dH/dxi + G_big x2 ] = W3 @ [ m ; x2 ]
    # where dH/dxi = K_blk^T m, u = -G_c^T dH/dxi, F = J - gamma*I.
    lin = _vpu_matmul(w_m, m) + _vpu_matmul(w_x2, x2)             # (3N, B)
    u_scaled = lin[0:n, :]                                        # (N,  B)
    dxi_dt = lin[n:3 * n, :]                                      # (2N, B)

    # Pairwise Kuramoto interaction sum (torch: interactions.sum(axis=0)):
    #   s[j, b] = sum_i adj[i, j] * cos(x1[j,b] - x1[i,b]) * (x2[j,b] - x2[i,b])
    # Unrolled over i (N is tiny): pure VPU/EUP work on lane-dense (N, B) tiles.
    s = None
    for i in range(n):
        term = (adjT[:, i:i + 1]
                * jnp.cos(x1 - x1[i:i + 1, :])
                * (x2 - x2[i:i + 1, :]))
        s = term if s is None else s + term

    dxdt = u_scaled * s                                           # (N, B)

    out_ref[0:n, :] = x2
    out_ref[n:2 * n, :] = dxdt
    out_ref[2 * n:4 * n, :] = dxi_dt


def make_kuramoto_params(adj_mat, K, b, G, coupling, n_nodes):
    """One-time parameter precompute, hoisted out of the per-step forward.

    Everything here depends only on module parameters: the block-diagonal K,
    the kron/tile products, the gamma eigendecomposition (host numpy), the
    fused linear map W3 and the packing of all constants into one slab.
    """
    n = n_nodes
    adj = np.asarray(adj_mat, np.float64)
    K = np.asarray(K, np.float64)
    b = np.asarray(b, np.float64).reshape(2 * n, 1)
    G = np.asarray(G, np.float64).reshape(2 * n, 1)

    kblk = np.zeros((2 * n, 2 * n))
    for i in range(n):
        kblk[2 * i:2 * i + 2, 2 * i:2 * i + 2] = K[i]

    kron_adj = np.kron(adj, np.ones((2, 1)))
    g_c = np.tile(G, (1, n)) * kron_adj           # (2N, N)  G without 1/N
    g_big = g_c / n                               # (2N, N)  G with 1/N

    # gamma = 0.85 * max eigenvalue of G_big G_big^T (symmetric PSD).
    # TODO(synk): torch.linalg.eigvals has no Pallas equivalent; it is
    # parameter-only, so it is computed once here on host (eigvalsh).
    gamma = 0.85 * float(np.max(np.linalg.eigvalsh(g_big @ g_big.T)))

    j_mat = np.kron(np.eye(n), np.array([[0.0, -1.0], [1.0, 0.0]]))
    f_mat = j_mat - gamma * np.eye(2 * n)         # F = J - gamma*I

    # Fused linear map: [ (coupling/N)*u ; dxi_dt ] = W3 @ [ m ; x2 ]
    cn = float(coupling) / n
    w3 = np.zeros((3 * n, 3 * n))
    w3[0:n, 0:2 * n] = -cn * (g_c.T @ kblk.T)
    w3[n:3 * n, 0:2 * n] = f_mat @ kblk.T
    w3[n:3 * n, 2 * n:3 * n] = g_big

    # Pack all constants into one lane-padded slab -> a single constant DMA.
    cols = max(3 * n, _LANE)
    slab = np.zeros((8 * n, cols), np.float32)
    slab[0:2 * n, 0:2 * n] = kblk
    slab[2 * n:5 * n, 0:3 * n] = w3
    slab[5 * n:6 * n, 0:n] = adj.T                # adjT[j, i] = adj[i, j]
    slab[6 * n:8 * n, 0:1] = b

    return {"slab": jnp.asarray(slab), "n_nodes": n, "gamma": gamma}


def kuramoto_forward(t, x, params):
    """Per-step forward. x: (4N, B) float32 batch of states (B >= 1)."""
    del t  # unused, matches the torch forward signature
    n = params["n_nodes"]
    slab = params["slab"]

    x = x.astype(jnp.float32)
    assert x.shape[0] == 4 * n, "Input dimensions do not match, check lengths"
    b_in = x.shape[1]

    # Lane tile: as large as possible up to _MAX_LANE_TILE, always a multiple
    # of 128 -> lane-dense unmasked stores, fewer grid steps for big batches.
    b_tile = min(_MAX_LANE_TILE, pl.cdiv(b_in, _LANE) * _LANE)
    n_tiles = pl.cdiv(b_in, b_tile)
    b_pad = n_tiles * b_tile
    if b_pad != b_in:
        x = jnp.pad(x, ((0, 0), (0, b_pad - b_in)))

    kernel = functools.partial(_kuramoto_kernel, n_nodes=n)
    out = pl.pallas_call(
        kernel,
        out_shape=jax.ShapeDtypeStruct((4 * n, b_pad), jnp.float32),
        grid_spec=pltpu.PrefetchScalarGridSpec(
            num_scalar_prefetch=0,
            grid=(n_tiles,),
            in_specs=[
                pl.BlockSpec(slab.shape, lambda i: (0, 0)),        # const slab
                pl.BlockSpec((4 * n, b_tile), lambda i: (0, i)),   # state tile
            ],
            out_specs=pl.BlockSpec((4 * n, b_tile), lambda i: (0, i)),
        ),
        compiler_params=pltpu.CompilerParams(
            dimension_semantics=("parallel",)),
    )(slab, x)
    return out[:, :b_in]


def reference_forward(x, adj, K, b, G, coupling, n):
    """Pure numpy (float64) transcription of the torch forward, batched over columns."""
    x = np.asarray(x, np.float64)
    adj = np.asarray(adj, np.float64)
    K = np.asarray(K, np.float64)
    b = np.asarray(b, np.float64).reshape(2 * n, 1)
    G = np.asarray(G, np.float64).reshape(2 * n, 1)

    x1, x2, xi = x[0:n], x[n:2 * n], x[2 * n:4 * n]

    g_ij = np.cos(x1[None, :, :] - x1[:, None, :])    # cos(x1[j] - x1[i])
    x_ij = x2[None, :, :] - x2[:, None, :]            # x2[j] - x2[i]
    interactions = adj[:, :, None] * g_ij * x_ij
    s = interactions.sum(axis=0)                      # (N, B)

    kblk = np.zeros((2 * n, 2 * n))
    for i in range(n):
        kblk[2 * i:2 * i + 2, 2 * i:2 * i + 2] = K[i]
    kron_adj = np.kron(adj, np.ones((2, 1)))
    g_c = np.tile(G, (1, n)) * kron_adj
    g_big = g_c / n

    dH = kblk.T @ np.tanh(kblk @ xi + b)
    u = -g_c.T @ dH
    dxdt = coupling / n * u * s

    gamma = 0.85 * np.max(np.real(np.linalg.eigvals(g_big @ g_big.T)))
    j_mat = np.kron(np.eye(n), np.array([[0.0, -1.0], [1.0, 0.0]]))
    f_mat = j_mat - gamma * np.eye(2 * n)
    dxi_dt = f_mat @ dH + g_big @ x2

    return np.concatenate([x2, dxdt, dxi_dt], axis=0)


if __name__ == "__main__":
    n_nodes = 4
    coupling = 2.0

    key = jax.random.PRNGKey(0)
    k_K, k_b, k_G, k_x = jax.random.split(key, 4)

    # deterministic "parameters" (same shapes as the torch module's __init__)
    adj_mat = (jnp.ones((n_nodes, n_nodes), jnp.float32)
               - jnp.eye(n_nodes, dtype=jnp.float32))
    K = jax.random.uniform(k_K, (n_nodes, 2, 2), dtype=jnp.float32)
    b = jax.random.uniform(k_b, (2 * n_nodes, 1), dtype=jnp.float32)
    G = jax.random.uniform(k_G, (2 * n_nodes, 1), dtype=jnp.float32)

    # One-time parameter precompute (eigendecomposition etc.) — NOT per step.
    params = make_kuramoto_params(adj_mat, K, b, G, coupling, n_nodes)
    fwd = jax.jit(functools.partial(kuramoto_forward, params=params))
    t = 0.0  # unused by the forward pass

    # Batched evaluation: 256 independent states along the lane axis
    # (single 256-lane tile; the "parallel" axis shards across v7x's 2 TCs
    # when there is more than one tile).
    batch = 256
    xb = jax.random.normal(k_x, (4 * n_nodes, batch), dtype=jnp.float32)
    out_b = jax.block_until_ready(fwd(t, xb))
    ref_b = reference_forward(xb, adj_mat, K, b, G, coupling, n_nodes)
    assert out_b.shape == (4 * n_nodes, batch)
    np.testing.assert_allclose(np.asarray(out_b), ref_b, rtol=1e-4, atol=1e-4)

    # Single-state call, identical to the torch forward's (4N, 1) column input.
    x_col = xb[:, 0:1]
    out_1 = jax.block_until_ready(fwd(t, x_col))
    assert out_1.shape == (4 * n_nodes, 1)
    np.testing.assert_allclose(np.asarray(out_1), ref_b[:, 0:1],
                               rtol=1e-4, atol=1e-4)

    print("KERNEL_OK")
</pallas_src>

<mosaic_0001>
module attributes {stable_mosaic.version = 11 : i64} {
  func.func @_kuramoto_kernel(%arg0: i32, %arg1: memref<32x128xf32, #tpu.memory_space<vmem>>, %arg2: memref<16x256xf32, #tpu.memory_space<vmem>>, %arg3: memref<16x256xf32, #tpu.memory_space<vmem>>) attributes {dimension_semantics = [#tpu.dimension_semantics<parallel>], iteration_bounds = array<i64: 1>, scalar_prefetch = 0 : i64, scratch_operands = 0 : i64, tpu.core_type = #tpu.core_type<tc>, window_params = [{pipeline_mode = #tpu.pipeline_mode<synchronous>, transform_indices = @transform_0, window_bounds = array<i64: 32, 128>}, {transform_indices = @transform_1, window_bounds = array<i64: 16, 256>}, {transform_indices = @transform_2, window_bounds = array<i64: 16, 256>}]} {
    %c0 = arith.constant 0 : index
    %c0_0 = arith.constant 0 : index
    %0 = vector.load %arg2[%c0, %c0_0] : memref<16x256xf32, #tpu.memory_space<vmem>>, vector<16x256xf32>
    %1 = vector.extract_strided_slice %0 {offsets = [0, 0], sizes = [4, 256], strides = [1, 1]} : vector<16x256xf32> to vector<4x256xf32>
    %2 = vector.extract_strided_slice %0 {offsets = [4, 0], sizes = [4, 256], strides = [1, 1]} : vector<16x256xf32> to vector<4x256xf32>
    %3 = vector.extract_strided_slice %0 {offsets = [8, 0], sizes = [8, 256], strides = [1, 1]} : vector<16x256xf32> to vector<8x256xf32>
    %c0_1 = arith.constant 0 : index
    %c0_2 = arith.constant 0 : index
    %4 = vector.load %arg1[%c0_1, %c0_2] : memref<32x128xf32, #tpu.memory_space<vmem>>, vector<32x128xf32>
    %5 = vector.extract_strided_slice %4 {offsets = [0, 0], sizes = [8, 8], strides = [1, 1]} : vector<32x128xf32> to vector<8x8xf32>
    %6 = vector.extract_strided_slice %4 {offsets = [8, 0], sizes = [12, 8], strides = [1, 1]} : vector<32x128xf32> to vector<12x8xf32>
    %7 = vector.extract_strided_slice %4 {offsets = [8, 8], sizes = [12, 4], strides = [1, 1]} : vector<32x128xf32> to vector<12x4xf32>
    %8 = vector.extract_strided_slice %4 {offsets = [20, 0], sizes = [4, 4], strides = [1, 1]} : vector<32x128xf32> to vector<4x4xf32>
    %9 = vector.extract_strided_slice %4 {offsets = [24, 0], sizes = [8, 1], strides = [1, 1]} : vector<32x128xf32> to vector<8x1xf32>
    %10 = vector.extract_strided_slice %5 {offsets = [0, 0], sizes = [8, 1], strides = [1, 1]} : vector<8x8xf32> to vector<8x1xf32>
    %11 = vector.extract_strided_slice %3 {offsets = [0, 0], sizes = [1, 256], strides = [1, 1]} : vector<8x256xf32> to vector<1x256xf32>
    %12 = vector.broadcast %10 : vector<8x1xf32> to vector<8x256xf32>
    %13 = vector.broadcast %11 : vector<1x256xf32> to vector<8x256xf32>
    %14 = arith.mulf %12, %13 : vector<8x256xf32>
    %15 = vector.extract_strided_slice %5 {offsets = [0, 1], sizes = [8, 1], strides = [1, 1]} : vector<8x8xf32> to vector<8x1xf32>
    %16 = vector.extract_strided_slice %3 {offsets = [1, 0], sizes = [1, 256], strides = [1, 1]} : vector<8x256xf32> to vector<1x256xf32>
    %17 = vector.broadcast %15 : vector<8x1xf32> to vector<8x256xf32>
    %18 = vector.broadcast %16 : vector<1x256xf32> to vector<8x256xf32>
    %19 = arith.mulf %17, %18 : vector<8x256xf32>
    %20 = arith.addf %14, %19 : vector<8x256xf32>
    %21 = vector.extract_strided_slice %5 {offsets = [0, 2], sizes = [8, 1], strides = [1, 1]} : vector<8x8xf32> to vector<8x1xf32>
    %22 = vector.extract_strided_slice %3 {offsets = [2, 0], sizes = [1, 256], strides = [1, 1]} : vector<8x256xf32> to vector<1x256xf32>
    %23 = vector.broadcast %21 : vector<8x1xf32> to vector<8x256xf32>
    %24 = vector.broadcast %22 : vector<1x256xf32> to vector<8x256xf32>
    %25 = arith.mulf %23, %24 : vector<8x256xf32>
    %26 = arith.addf %20, %25 : vector<8x256xf32>
    %27 = vector.extract_strided_slice %5 {offsets = [0, 3], sizes = [8, 1], strides = [1, 1]} : vector<8x8xf32> to vector<8x1xf32>
    %28 = vector.extract_strided_slice %3 {offsets = [3, 0], sizes = [1, 256], strides = [1, 1]} : vector<8x256xf32> to vector<1x256xf32>
    %29 = vector.broadcast %27 : vector<8x1xf32> to vector<8x256xf32>
    %30 = vector.broadcast %28 : vector<1x256xf32> to vector<8x256xf32>
    %31 = arith.mulf %29, %30 : vector<8x256xf32>
    %32 = arith.addf %26, %31 : vector<8x256xf32>
    %33 = vector.extract_strided_slice %5 {offsets = [0, 4], sizes = [8, 1], strides = [1, 1]} : vector<8x8xf32> to vector<8x1xf32>
    %34 = vector.extract_strided_slice %3 {offsets = [4, 0], sizes = [1, 256], strides = [1, 1]} : vector<8x256xf32> to vector<1x256xf32>
    %35 = vector.broadcast %33 : vector<8x1xf32> to vector<8x256xf32>
    %36 = vector.broadcast %34 : vector<1x256xf32> to vector<8x256xf32>
    %37 = arith.mulf %35, %36 : vector<8x256xf32>
    %38 = arith.addf %32, %37 : vector<8x256xf32>
    %39 = vector.extract_strided_slice %5 {offsets = [0, 5], sizes = [8, 1], strides = [1, 1]} : vector<8x8xf32> to vector<8x1xf32>
    %40 = vector.extract_strided_slice %3 {offsets = [5, 0], sizes = [1, 256], strides = [1, 1]} : vector<8x256xf32> to vector<1x256xf32>
    %41 = vector.broadcast %39 : vector<8x1xf32> to vector<8x256xf32>
    %42 = vector.broadcast %40 : vector<1x256xf32> to vector<8x256xf32>
    %43 = arith.mulf %41, %42 : vector<8x256xf32>
    %44 = arith.addf %38, %43 : vector<8x256xf32>
    %45 = vector.extract_strided_slice %5 {offsets = [0, 6], sizes = [8, 1], strides = [1, 1]} : vector<8x8xf32> to vector<8x1xf32>
    %46 = vector.extract_strided_slice %3 {offsets = [6, 0], sizes = [1, 256], strides = [1, 1]} : vector<8x256xf32> to vector<1x256xf32>
    %47 = vector.broadcast %45 : vector<8x1xf32> to vector<8x256xf32>
    %48 = vector.broadcast %46 : vector<1x256xf32> to vector<8x256xf32>
    %49 = arith.mulf %47, %48 : vector<8x256xf32>
    %50 = arith.addf %44, %49 : vector<8x256xf32>
    %51 = vector.extract_strided_slice %5 {offsets = [0, 7], sizes = [8, 1], strides = [1, 1]} : vector<8x8xf32> to vector<8x1xf32>
    %52 = vector.extract_strided_slice %3 {offsets = [7, 0], sizes = [1, 256], strides = [1, 1]} : vector<8x256xf32> to vector<1x256xf32>
    %53 = vector.broadcast %51 : vector<8x1xf32> to vector<8x256xf32>
    %54 = vector.broadcast %52 : vector<1x256xf32> to vector<8x256xf32>
    %55 = arith.mulf %53, %54 : vector<8x256xf32>
    %56 = arith.addf %50, %55 : vector<8x256xf32>
    %57 = vector.broadcast %9 : vector<8x1xf32> to vector<8x256xf32>
    %58 = arith.addf %56, %57 : vector<8x256xf32>
    %59 = math.tanh %58 : vector<8x256xf32>
    %60 = vector.extract_strided_slice %6 {offsets = [0, 0], sizes = [12, 1], strides = [1, 1]} : vector<12x8xf32> to vector<12x1xf32>
    %61 = vector.extract_strided_slice %59 {offsets = [0, 0], sizes = [1, 256], strides = [1, 1]} : vector<8x256xf32> to vector<1x256xf32>
    %62 = vector.broadcast %60 : vector<12x1xf32> to vector<12x256xf32>
    %63 = vector.broadcast %61 : vector<1x256xf32> to vector<12x256xf32>
    %64 = arith.mulf %62, %63 : vector<12x256xf32>
    %65 = vector.extract_strided_slice %6 {offsets = [0, 1], sizes = [12, 1], strides = [1, 1]} : vector<12x8xf32> to vector<12x1xf32>
    %66 = vector.extract_strided_slice %59 {offsets = [1, 0], sizes = [1, 256], strides = [1, 1]} : vector<8x256xf32> to vector<1x256xf32>
    %67 = vector.broadcast %65 : vector<12x1xf32> to vector<12x256xf32>
    %68 = vector.broadcast %66 : vector<1x256xf32> to vector<12x256xf32>
    %69 = arith.mulf %67, %68 : vector<12x256xf32>
    %70 = arith.addf %64, %69 : vector<12x256xf32>
    %71 = vector.extract_strided_slice %6 {offsets = [0, 2], sizes = [12, 1], strides = [1, 1]} : vector<12x8xf32> to vector<12x1xf32>
    %72 = vector.extract_strided_slice %59 {offsets = [2, 0], sizes = [1, 256], strides = [1, 1]} : vector<8x256xf32> to vector<1x256xf32>
    %73 = vector.broadcast %71 : vector<12x1xf32> to vector<12x256xf32>
    %74 = vector.broadcast %72 : vector<1x256xf32> to vector<12x256xf32>
    %75 = arith.mulf %73, %74 : vector<12x256xf32>
    %76 = arith.addf %70, %75 : vector<12x256xf32>
    %77 = vector.extract_strided_slice %6 {offsets = [0, 3], sizes = [12, 1], strides = [1, 1]} : vector<12x8xf32> to vector<12x1xf32>
    %78 = vector.extract_strided_slice %59 {offsets = [3, 0], sizes = [1, 256], strides = [1, 1]} : vector<8x256xf32> to vector<1x256xf32>
    %79 = vector.broadcast %77 : vector<12x1xf32> to vector<12x256xf32>
    %80 = vector.broadcast %78 : vector<1x256xf32> to vector<12x256xf32>
    %81 = arith.mulf %79, %80 : vector<12x256xf32>
    %82 = arith.addf %76, %81 : vector<12x256xf32>
    %83 = vector.extract_strided_slice %6 {offsets = [0, 4], sizes = [12, 1], strides = [1, 1]} : vector<12x8xf32> to vector<12x1xf32>
    %84 = vector.extract_strided_slice %59 {offsets = [4, 0], sizes = [1, 256], strides = [1, 1]} : vector<8x256xf32> to vector<1x256xf32>
    %85 = vector.broadcast %83 : vector<12x1xf32> to vector<12x256xf32>
    %86 = vector.broadcast %84 : vector<1x256xf32> to vector<12x256xf32>
    %87 = arith.mulf %85, %86 : vector<12x256xf32>
    %88 = arith.addf %82, %87 : vector<12x256xf32>
    %89 = vector.extract_strided_slice %6 {offsets = [0, 5], sizes = [12, 1], strides = [1, 1]} : vector<12x8xf32> to vector<12x1xf32>
    %90 = vector.extract_strided_slice %59 {offsets = [5, 0], sizes = [1, 256], strides = [1, 1]} : vector<8x256xf32> to vector<1x256xf32>
    %91 = vector.broadcast %89 : vector<12x1xf32> to vector<12x256xf32>
    %92 = vector.broadcast %90 : vector<1x256xf32> to vector<12x256xf32>
    %93 = arith.mulf %91, %92 : vector<12x256xf32>
    %94 = arith.addf %88, %93 : vector<12x256xf32>
    %95 = vector.extract_strided_slice %6 {offsets = [0, 6], sizes = [12, 1], strides = [1, 1]} : vector<12x8xf32> to vector<12x1xf32>
    %96 = vector.extract_strided_slice %59 {offsets = [6, 0], sizes = [1, 256], strides = [1, 1]} : vector<8x256xf32> to vector<1x256xf32>
    %97 = vector.broadcast %95 : vector<12x1xf32> to vector<12x256xf32>
    %98 = vector.broadcast %96 : vector<1x256xf32> to vector<12x256xf32>
    %99 = arith.mulf %97, %98 : vector<12x256xf32>
    %100 = arith.addf %94, %99 : vector<12x256xf32>
    %101 = vector.extract_strided_slice %6 {offsets = [0, 7], sizes = [12, 1], strides = [1, 1]} : vector<12x8xf32> to vector<12x1xf32>
    %102 = vector.extract_strided_slice %59 {offsets = [7, 0], sizes = [1, 256], strides = [1, 1]} : vector<8x256xf32> to vector<1x256xf32>
    %103 = vector.broadcast %101 : vector<12x1xf32> to vector<12x256xf32>
    %104 = vector.broadcast %102 : vector<1x256xf32> to vector<12x256xf32>
    %105 = arith.mulf %103, %104 : vector<12x256xf32>
    %106 = arith.addf %100, %105 : vector<12x256xf32>
    %107 = vector.extract_strided_slice %7 {offsets = [0, 0], sizes = [12, 1], strides = [1, 1]} : vector<12x4xf32> to vector<12x1xf32>
    %108 = vector.extract_strided_slice %2 {offsets = [0, 0], sizes = [1, 256], strides = [1, 1]} : vector<4x256xf32> to vector<1x256xf32>
    %109 = vector.broadcast %107 : vector<12x1xf32> to vector<12x256xf32>
    %110 = vector.broadcast %108 : vector<1x256xf32> to vector<12x256xf32>
    %111 = arith.mulf %109, %110 : vector<12x256xf32>
    %112 = vector.extract_strided_slice %7 {offsets = [0, 1], sizes = [12, 1], strides = [1, 1]} : vector<12x4xf32> to vector<12x1xf32>
    %113 = vector.extract_strided_slice %2 {offsets = [1, 0], sizes = [1, 256], strides = [1, 1]} : vector<4x256xf32> to vector<1x256xf32>
    %114 = vector.broadcast %112 : vector<12x1xf32> to vector<12x256xf32>
    %115 = vector.broadcast %113 : vector<1x256xf32> to vector<12x256xf32>
    %116 = arith.mulf %114, %115 : vector<12x256xf32>
    %117 = arith.addf %111, %116 : vector<12x256xf32>
    %118 = vector.extract_strided_slice %7 {offsets = [0, 2], sizes = [12, 1], strides = [1, 1]} : vector<12x4xf32> to vector<12x1xf32>
    %119 = vector.extract_strided_slice %2 {offsets = [2, 0], sizes = [1, 256], strides = [1, 1]} : vector<4x256xf32> to vector<1x256xf32>
    %120 = vector.broadcast %118 : vector<12x1xf32> to vector<12x256xf32>
    %121 = vector.broadcast %119 : vector<1x256xf32> to vector<12x256xf32>
    %122 = arith.mulf %120, %121 : vector<12x256xf32>
    %123 = arith.addf %117, %122 : vector<12x256xf32>
    %124 = vector.extract_strided_slice %7 {offsets = [0, 3], sizes = [12, 1], strides = [1, 1]} : vector<12x4xf32> to vector<12x1xf32>
    %125 = vector.extract_strided_slice %2 {offsets = [3, 0], sizes = [1, 256], strides = [1, 1]} : vector<4x256xf32> to vector<1x256xf32>
    %126 = vector.broadcast %124 : vector<12x1xf32> to vector<12x256xf32>
    %127 = vector.broadcast %125 : vector<1x256xf32> to vector<12x256xf32>
    %128 = arith.mulf %126, %127 : vector<12x256xf32>
    %129 = arith.addf %123, %128 : vector<12x256xf32>
    %130 = arith.addf %106, %129 : vector<12x256xf32>
    %131 = vector.extract_strided_slice %130 {offsets = [0, 0], sizes = [4, 256], strides = [1, 1]} : vector<12x256xf32> to vector<4x256xf32>
    %132 = vector.extract_strided_slice %130 {offsets = [4, 0], sizes = [8, 256], strides = [1, 1]} : vector<12x256xf32> to vector<8x256xf32>
    %133 = vector.extract_strided_slice %8 {offsets = [0, 0], sizes = [4, 1], strides = [1, 1]} : vector<4x4xf32> to vector<4x1xf32>
    %134 = vector.extract_strided_slice %1 {offsets = [0, 0], sizes = [1, 256], strides = [1, 1]} : vector<4x256xf32> to vector<1x256xf32>
    %135 = vector.broadcast %134 : vector<1x256xf32> to vector<4x256xf32>
    %136 = arith.subf %1, %135 : vector<4x256xf32>
    %137 = math.cos %136 : vector<4x256xf32>
    %138 = vector.broadcast %133 : vector<4x1xf32> to vector<4x256xf32>
    %139 = arith.mulf %138, %137 : vector<4x256xf32>
    %140 = vector.extract_strided_slice %2 {offsets = [0, 0], sizes = [1, 256], strides = [1, 1]} : vector<4x256xf32> to vector<1x256xf32>
    %141 = vector.broadcast %140 : vector<1x256xf32> to vector<4x256xf32>
    %142 = arith.subf %2, %141 : vector<4x256xf32>
    %143 = arith.mulf %139, %142 : vector<4x256xf32>
    %144 = vector.extract_strided_slice %8 {offsets = [0, 1], sizes = [4, 1], strides = [1, 1]} : vector<4x4xf32> to vector<4x1xf32>
    %145 = vector.extract_strided_slice %1 {offsets = [1, 0], sizes = [1, 256], strides = [1, 1]} : vector<4x256xf32> to vector<1x256xf32>
    %146 = vector.broadcast %145 : vector<1x256xf32> to vector<4x256xf32>
    %147 = arith.subf %1, %146 : vector<4x256xf32>
    %148 = math.cos %147 : vector<4x256xf32>
    %149 = vector.broadcast %144 : vector<4x1xf32> to vector<4x256xf32>
    %150 = arith.mulf %149, %148 : vector<4x256xf32>
    %151 = vector.extract_strided_slice %2 {offsets = [1, 0], sizes = [1, 256], strides = [1, 1]} : vector<4x256xf32> to vector<1x256xf32>
    %152 = vector.broadcast %151 : vector<1x256xf32> to vector<4x256xf32>
    %153 = arith.subf %2, %152 : vector<4x256xf32>
    %154 = arith.mulf %150, %153 : vector<4x256xf32>
    %155 = arith.addf %143, %154 : vector<4x256xf32>
    %156 = vector.extract_strided_slice %8 {offsets = [0, 2], sizes = [4, 1], strides = [1, 1]} : vector<4x4xf32> to vector<4x1xf32>
    %157 = vector.extract_strided_slice %1 {offsets = [2, 0], sizes = [1, 256], strides = [1, 1]} : vector<4x256xf32> to vector<1x256xf32>
    %158 = vector.broadcast %157 : vector<1x256xf32> to vector<4x256xf32>
    %159 = arith.subf %1, %158 : vector<4x256xf32>
    %160 = math.cos %159 : vector<4x256xf32>
    %161 = vector.broadcast %156 : vector<4x1xf32> to vector<4x256xf32>
    %162 = arith.mulf %161, %160 : vector<4x256xf32>
    %163 = vector.extract_strided_slice %2 {offsets = [2, 0], sizes = [1, 256], strides = [1, 1]} : vector<4x256xf32> to vector<1x256xf32>
    %164 = vector.broadcast %163 : vector<1x256xf32> to vector<4x256xf32>
    %165 = arith.subf %2, %164 : vector<4x256xf32>
    %166 = arith.mulf %162, %165 : vector<4x256xf32>
    %167 = arith.addf %155, %166 : vector<4x256xf32>
    %168 = vector.extract_strided_slice %8 {offsets = [0, 3], sizes = [4, 1], strides = [1, 1]} : vector<4x4xf32> to vector<4x1xf32>
    %169 = vector.extract_strided_slice %1 {offsets = [3, 0], sizes = [1, 256], strides = [1, 1]} : vector<4x256xf32> to vector<1x256xf32>
    %170 = vector.broadcast %169 : vector<1x256xf32> to vector<4x256xf32>
    %171 = arith.subf %1, %170 : vector<4x256xf32>
    %172 = math.cos %171 : vector<4x256xf32>
    %173 = vector.broadcast %168 : vector<4x1xf32> to vector<4x256xf32>
    %174 = arith.mulf %173, %172 : vector<4x256xf32>
    %175 = vector.extract_strided_slice %2 {offsets = [3, 0], sizes = [1, 256], strides = [1, 1]} : vector<4x256xf32> to vector<1x256xf32>
    %176 = vector.broadcast %175 : vector<1x256xf32> to vector<4x256xf32>
    %177 = arith.subf %2, %176 : vector<4x256xf32>
    %178 = arith.mulf %174, %177 : vector<4x256xf32>
    %179 = arith.addf %167, %178 : vector<4x256xf32>
    %180 = arith.mulf %131, %179 : vector<4x256xf32>
    %c0_3 = arith.constant 0 : index
    %c0_4 = arith.constant 0 : index
    %181 = vector.load %arg3[%c0_3, %c0_4] : memref<16x256xf32, #tpu.memory_space<vmem>>, vector<4x256xf32>
    tpu.vector_store %arg3[%c0_3, %c0_4], %2 {strides = array<i32>} : memref<16x256xf32, #tpu.memory_space<vmem>>, vector<4x256xf32>,
    %c4 = arith.constant 4 : index
    %c0_5 = arith.constant 0 : index
    %182 = vector.load %arg3[%c4, %c0_5] : memref<16x256xf32, #tpu.memory_space<vmem>>, vector<4x256xf32>
    tpu.vector_store %arg3[%c4, %c0_5], %180 {strides = array<i32>} : memref<16x256xf32, #tpu.memory_space<vmem>>, vector<4x256xf32>,
    %c8 = arith.constant 8 : index
    %c0_6 = arith.constant 0 : index
    %183 = vector.load %arg3[%c8, %c0_6] : memref<16x256xf32, #tpu.memory_space<vmem>>, vector<8x256xf32>
    tpu.vector_store %arg3[%c8, %c0_6], %132 {strides = array<i32>} : memref<16x256xf32, #tpu.memory_space<vmem>>, vector<8x256xf32>,
    return
  }
  func.func @transform_0(%arg0: i32) -> (i32, i32) {
    %c0_i32 = arith.constant 0 : i32
    %c0_i32_0 = arith.constant 0 : i32
    %c0_i32_1 = arith.constant 0 : i32
    return %c0_i32, %c0_i32_0 : i32, i32
  }
  func.func @transform_1(%arg0: i32) -> (i32, i32) {
    %c0_i32 = arith.constant 0 : i32
    %c0_i32_0 = arith.constant 0 : i32
    return %c0_i32, %arg0 : i32, i32
  }
  func.func @transform_2(%arg0: i32) -> (i32, i32) {
    %c0_i32 = arith.constant 0 : i32
    %c0_i32_0 = arith.constant 0 : i32
    return %c0_i32, %arg0 : i32, i32
  }
}

</mosaic_0001>

<llo_original>
// kernel: kuramoto_forward.1
$region0: #{kuramoto_forward.1}
  #allocation0 [shape = 'u32[]', space=smem, size = 0x4, offset = 0x4, fixed_abs, tag = 'smem constant byte address 0x4 - core index']
  #allocation1 [shape = 'u32[144,128]{1,0:T(1,128)}', space=vmem, size = 0x12000, scoped, tag = 'internal scratch']
  %s0 = inlined_call_operand.hbm [shape: f32[32,128], index: 0, kind: input, shape index: {}]
  %s1 = inlined_call_operand.hbm [shape: f32[16,256], index: 1, kind: input, shape index: {}]
  %s2 = inlined_call_operand.hbm [shape: f32[16,256], index: 2, kind: output, shape index: {}]
  %s3 = sld [smem:[#allocation0]]
  $region26: #{kuramoto_forward.1} parent=0
    _
  %s5 = ssub.s32 1, %s3
  %s6 = scalar_select 0, %s5, %s3
  $region1: #{kuramoto_forward.1} parent=0
    #allocation2 [shape = 'u8[16384]{0}', space=vmem, size = 0x4000, scoped, tag = 'input window, operand 0, single buffered']
    #allocation3 [shape = 's32[1]{0}', space=sflag, size = 0x4, scoped, tag = 'scoped memory for kuramoto_forward.1']
    #allocation4 [shape = 's32[1]{0}', space=sflag, size = 0x4, scoped, tag = 'scoped memory for kuramoto_forward.1']
    #allocation5 [shape = 'u8[16384]{0}', space=vmem, size = 0x4000, scoped, tag = 'input window, operand 1, single buffered']
    #allocation6 [shape = 's32[1]{0}', space=sflag, size = 0x4, scoped, tag = 'scoped memory for kuramoto_forward.1']
    #allocation7 [shape = 'u8[16384]{0}', space=vmem, size = 0x4000, scoped, tag = 'output window, operand 0, single buffered']
    %7 = vsyncpa [#allocation3], 0
    %8 = vsyncpa [#allocation6], 0
    %9 = vsyncpa [#allocation4], 0
    // Predicated region
    $region2: #{kuramoto_forward.1} parent=1 // pred_check
      _
    $region3: #{kuramoto_forward.1} parent=1 // pred_check_branch
      %11 = sbr.rel (0) target = $region5
    $region4: #{kuramoto_forward.1} parent=1 // pred_region
      %s13 = ssub.s32 512, 512
      %14 = vsyncadd [#allocation3], %s13
      %s15 = sshll.u32 [#allocation2], 4
      %s16 = int_to_ptr.vmem [resolvable:$true] %s15
      %21 = dma.hbm_to_vmem [thread:$0]  %s0, 512, %s16, [#allocation3], 128, 128, 8
    $region5: #{kuramoto_forward.1} parent=1 // pred_fallthru
      _
    // Predicated region
    $region6: #{kuramoto_forward.1} parent=1 // pred_check
      _
    $region7: #{kuramoto_forward.1} parent=1 // pred_check_branch
      %23 = sbr.rel (0) target = $region9
    $region8: #{kuramoto_forward.1} parent=1 // pred_region
      %s25 = ssub.s32 512, 512
      %26 = vsyncadd [#allocation6], %s25
      %s27 = sshll.u32 [#allocation5], 4
      %s28 = int_to_ptr.vmem [resolvable:$true] %s27
      %33 = dma.hbm_to_vmem [thread:$0]  %s1, 512, %s28, [#allocation6], 256, 256, 16
    $region9: #{kuramoto_forward.1} parent=1 // pred_fallthru
      _
    // Predicated region
    $region10: #{kuramoto_forward.1} parent=1 // pred_check
      _
    $region11: #{kuramoto_forward.1} parent=1 // pred_check_branch
      %35 = sbr.rel (0) target = $region13
    $region12: #{kuramoto_forward.1} parent=1 // pred_region
      %36 = dma.done [#allocation3], 512
    $region13: #{kuramoto_forward.1} parent=1 // pred_fallthru
      _
    // Predicated region
    $region14: #{kuramoto_forward.1} parent=1 // pred_check
      _
    $region15: #{kuramoto_forward.1} parent=1 // pred_check_branch
      %38 = sbr.rel (0) target = $region17
    $region16: #{kuramoto_forward.1} parent=1 // pred_region
      %39 = dma.done [#allocation6], 512
    $region17: #{kuramoto_forward.1} parent=1 // pred_fallthru
      _
    %v40 = vld [vmem:[#allocation5] sm:$0xff]
    %v41 = vld [vmem:[#allocation5 + $0x8] sm:$0xff]
    %v42 = vld [vmem:[#allocation5 + $0x10] sm:$0xff]
    %v43 = vld [vmem:[#allocation5 + $0x18] sm:$0xff]
    %v44 = vld [vmem:[#allocation2] sm:$0xff]
    %v45 = vld [vmem:[#allocation2 + $0x8] sm:$0xff]
    %v46 = vld [vmem:[#allocation2 + $0x10] sm:$0xff]
    %v47 = vld [vmem:[#allocation2 + $0x18] sm:$0xff]
    %49 = vset.pattern.permute.xlu0 0
    %50 = vperm.xlu0 %49, %v44
    %v51 = vpop.permute.xlu0 %50
    %v53 = vlaneseq
    %v54 = vshrl.u32 %v53, 7
    %v55 = vsub.s32 0, %v54
    %v56 = vrot.slane %v42, %v55
    %v57 = vlaneseq
    %v58 = vshrl.u32 %v57, 7
    %v59 = vsub.s32 0, %v58
    %v60 = vrot.slane %v43, %v59
    %v61 = vmul.f32 %v51, %v56
    %v62 = vmul.f32 %v51, %v60
    %63 = vset.pattern.permute.xlu0 1
    %64 = vperm.xlu0 %63, %v44
    %v65 = vpop.permute.xlu0 %64
    %v67 = vlaneseq
    %v68 = vshrl.u32 %v67, 7
    %v69 = vsub.s32 1, %v68
    %v70 = vrot.slane %v42, %v69
    %v71 = vlaneseq
    %v72 = vshrl.u32 %v71, 7
    %v73 = vsub.s32 1, %v72
    %v74 = vrot.slane %v43, %v73
    %v75 = vmul.f32 %v65, %v70
    %v76 = vmul.f32 %v65, %v74
    %v77 = vadd.f32 %v61, %v75
    %v78 = vadd.f32 %v62, %v76
    %79 = vset.pattern.permute.xlu0 2
    %80 = vperm.xlu0 %79, %v44
    %v81 = vpop.permute.xlu0 %80
    %v83 = vlaneseq
    %v84 = vshrl.u32 %v83, 7
    %v85 = vsub.s32 2, %v84
    %v86 = vrot.slane %v42, %v85
    %v87 = vlaneseq
    %v88 = vshrl.u32 %v87, 7
    %v89 = vsub.s32 2, %v88
    %v90 = vrot.slane %v43, %v89
    %v91 = vmul.f32 %v81, %v86
    %v92 = vmul.f32 %v81, %v90
    %v93 = vadd.f32 %v77, %v91
    %v94 = vadd.f32 %v78, %v92
    %95 = vset.pattern.permute.xlu0 3
    %96 = vperm.xlu0 %95, %v44
    %v97 = vpop.permute.xlu0 %96
    %v99 = vlaneseq
    %v100 = vshrl.u32 %v99, 7
    %v101 = vsub.s32 3, %v100
    %v102 = vrot.slane %v42, %v101
    %v103 = vlaneseq
    %v104 = vshrl.u32 %v103, 7
    %v105 = vsub.s32 3, %v104
    %v106 = vrot.slane %v43, %v105
    %v107 = vmul.f32 %v97, %v102
    %v108 = vmul.f32 %v97, %v106
    %v109 = vadd.f32 %v93, %v107
    %v110 = vadd.f32 %v94, %v108
    %111 = vset.pattern.permute.xlu0 4
    %112 = vperm.xlu0 %111, %v44
    %v113 = vpop.permute.xlu0 %112
    %v115 = vlaneseq
    %v116 = vshrl.u32 %v115, 7
    %v117 = vsub.s32 4, %v116
    %v118 = vrot.slane %v42, %v117
    %v119 = vlaneseq
    %v120 = vshrl.u32 %v119, 7
    %v121 = vsub.s32 4, %v120
    %v122 = vrot.slane %v43, %v121
    %v123 = vmul.f32 %v113, %v118
    %v124 = vmul.f32 %v113, %v122
    %v125 = vadd.f32 %v109, %v123
    %v126 = vadd.f32 %v110, %v124
    %127 = vset.pattern.permute.xlu0 5
    %128 = vperm.xlu0 %127, %v44
    %v129 = vpop.permute.xlu0 %128
    %v131 = vlaneseq
    %v132 = vshrl.u32 %v131, 7
    %v133 = vsub.s32 5, %v132
    %v134 = vrot.slane %v42, %v133
    %v135 = vlaneseq
    %v136 = vshrl.u32 %v135, 7
    %v137 = vsub.s32 5, %v136
    %v138 = vrot.slane %v43, %v137
    %v139 = vmul.f32 %v129, %v134
    %v140 = vmul.f32 %v129, %v138
    %v141 = vadd.f32 %v125, %v139
    %v142 = vadd.f32 %v126, %v140
    %143 = vset.pattern.permute.xlu0 6
    %144 = vperm.xlu0 %143, %v44
    %v145 = vpop.permute.xlu0 %144
    %v147 = vlaneseq
    %v148 = vshrl.u32 %v147, 7
    %v149 = vsub.s32 6, %v148
    %v150 = vrot.slane %v42, %v149
    %v151 = vlaneseq
    %v152 = vshrl.u32 %v151, 7
    %v153 = vsub.s32 6, %v152
    %v154 = vrot.slane %v43, %v153
    %v155 = vmul.f32 %v145, %v150
    %v156 = vmul.f32 %v145, %v154
    %v157 = vadd.f32 %v141, %v155
    %v158 = vadd.f32 %v142, %v156
    %159 = vset.pattern.permute.xlu0 7
    %160 = vperm.xlu0 %159, %v44
    %v161 = vpop.permute.xlu0 %160
    %v163 = vlaneseq
    %v164 = vshrl.u32 %v163, 7
    %v165 = vsub.s32 7, %v164
    %v166 = vrot.slane %v42, %v165
    %v167 = vlaneseq
    %v168 = vshrl.u32 %v167, 7
    %v169 = vsub.s32 7, %v168
    %v170 = vrot.slane %v43, %v169
    %v171 = vmul.f32 %v161, %v166
    %v172 = vmul.f32 %v161, %v170
    %v173 = vadd.f32 %v157, %v171
    %v174 = vadd.f32 %v158, %v172
    %176 = vset.pattern.permute.xlu0 0
    %177 = vperm.xlu0 %176, %v47
    %v178 = vpop.permute.xlu0 %177
    %v180 = vadd.f32 %v173, %v178
    %v181 = vadd.f32 %v174, %v178
    %v182 = vtanh.pop %v180
    %v183 = vtanh.pop %v181
    %185 = vset.pattern.permute.xlu0 0
    %186 = vperm.xlu0 %185, %v45
    %v187 = vpop.permute.xlu0 %186
    %190 = vset.pattern.permute.xlu0 0
    %191 = vperm.xlu0 %190, %v46
    %v192 = vpop.permute.xlu0 %191
    %v194 = vlaneseq
    %v195 = vshrl.u32 %v194, 7
    %v196 = vsub.s32 0, %v195
    %v197 = vrot.slane %v182, %v196
    %v198 = vlaneseq
    %v199 = vshrl.u32 %v198, 7
    %v200 = vsub.s32 0, %v199
    %v201 = vrot.slane %v183, %v200
    %v202 = vmul.f32 %v187, %v197
    %v203 = vmul.f32 %v187, %v201
    %v204 = vmul.f32 %v192, %v197
    %v205 = vmul.f32 %v192, %v201
    %206 = vset.pattern.permute.xlu0 1
    %207 = vperm.xlu0 %206, %v45
    %v208 = vpop.permute.xlu0 %207
    %210 = vset.pattern.permute.xlu0 1
    %211 = vperm.xlu0 %210, %v46
    %v212 = vpop.permute.xlu0 %211
    %v214 = vlaneseq
    %v215 = vshrl.u32 %v214, 7
    %v216 = vsub.s32 1, %v215
    %v217 = vrot.slane %v182, %v216
    %v218 = vlaneseq
    %v219 = vshrl.u32 %v218, 7
    %v220 = vsub.s32 1, %v219
    %v221 = vrot.slane %v183, %v220
    %v222 = vmul.f32 %v208, %v217
    %v223 = vmul.f32 %v208, %v221
    %v224 = vmul.f32 %v212, %v217
    %v225 = vmul.f32 %v212, %v221
    %v226 = vadd.f32 %v202, %v222
    %v227 = vadd.f32 %v203, %v223
    %v228 = vadd.f32 %v204, %v224
    %v229 = vadd.f32 %v205, %v225
    %230 = vset.pattern.permute.xlu0 2
    %231 = vperm.xlu0 %230, %v45
    %v232 = vpop.permute.xlu0 %231
    %234 = vset.pattern.permute.xlu0 2
    %235 = vperm.xlu0 %234, %v46
    %v236 = vpop.permute.xlu0 %235
    %v238 = vlaneseq
    %v239 = vshrl.u32 %v238, 7
    %v240 = vsub.s32 2, %v239
    %v241 = vrot.slane %v182, %v240
    %v242 = vlaneseq
    %v243 = vshrl.u32 %v242, 7
    %v244 = vsub.s32 2, %v243
    %v245 = vrot.slane %v183, %v244
    %v246 = vmul.f32 %v232, %v241
    %v247 = vmul.f32 %v232, %v245
    %v248 = vmul.f32 %v236, %v241
    %v249 = vmul.f32 %v236, %v245
    %v250 = vadd.f32 %v226, %v246
    %v251 = vadd.f32 %v227, %v247
    %v252 = vadd.f32 %v228, %v248
    %v253 = vadd.f32 %v229, %v249
    %254 = vset.pattern.permute.xlu0 3
    %255 = vperm.xlu0 %254, %v45
    %v256 = vpop.permute.xlu0 %255
    %258 = vset.pattern.permute.xlu0 3
    %259 = vperm.xlu0 %258, %v46
    %v260 = vpop.permute.xlu0 %259
    %v262 = vlaneseq
    %v263 = vshrl.u32 %v262, 7
    %v264 = vsub.s32 3, %v263
    %v265 = vrot.slane %v182, %v264
    %v266 = vlaneseq
    %v267 = vshrl.u32 %v266, 7
    %v268 = vsub.s32 3, %v267
    %v269 = vrot.slane %v183, %v268
    %v270 = vmul.f32 %v256, %v265
    %v271 = vmul.f32 %v256, %v269
    %v272 = vmul.f32 %v260, %v265
    %v273 = vmul.f32 %v260, %v269
    %v274 = vadd.f32 %v250, %v270
    %v275 = vadd.f32 %v251, %v271
    %v276 = vadd.f32 %v252, %v272
    %v277 = vadd.f32 %v253, %v273
    %278 = vset.pattern.permute.xlu0 4
    %279 = vperm.xlu0 %278, %v45
    %v280 = vpop.permute.xlu0 %279
    %282 = vset.pattern.permute.xlu0 4
    %283 = vperm.xlu0 %282, %v46
    %v284 = vpop.permute.xlu0 %283
    %v286 = vlaneseq
    %v287 = vshrl.u32 %v286, 7
    %v288 = vsub.s32 4, %v287
    %v289 = vrot.slane %v182, %v288
    %v290 = vlaneseq
    %v291 = vshrl.u32 %v290, 7
    %v292 = vsub.s32 4, %v291
    %v293 = vrot.slane %v183, %v292
    %v294 = vmul.f32 %v280, %v289
    %v295 = vmul.f32 %v280, %v293
    %v296 = vmul.f32 %v284, %v289
    %v297 = vmul.f32 %v284, %v293
    %v298 = vadd.f32 %v274, %v294
    %v299 = vadd.f32 %v275, %v295
    %v300 = vadd.f32 %v276, %v296
    %v301 = vadd.f32 %v277, %v297
    %302 = vset.pattern.permute.xlu0 5
    %303 = vperm.xlu0 %302, %v45
    %v304 = vpop.permute.xlu0 %303
    %306 = vset.pattern.permute.xlu0 5
    %307 = vperm.xlu0 %306, %v46
    %v308 = vpop.permute.xlu0 %307
    %v310 = vlaneseq
    %v311 = vshrl.u32 %v310, 7
    %v312 = vsub.s32 5, %v311
    %v313 = vrot.slane %v182, %v312
    %v314 = vlaneseq
    %v315 = vshrl.u32 %v314, 7
    %v316 = vsub.s32 5, %v315
    %v317 = vrot.slane %v183, %v316
    %v318 = vmul.f32 %v304, %v313
    %v319 = vmul.f32 %v304, %v317
    %v320 = vmul.f32 %v308, %v313
    %v321 = vmul.f32 %v308, %v317
    %v322 = vadd.f32 %v298, %v318
    %v323 = vadd.f32 %v299, %v319
    %v324 = vadd.f32 %v300, %v320
    %v325 = vadd.f32 %v301, %v321
    %326 = vset.pattern.permute.xlu0 6
    %327 = vperm.xlu0 %326, %v45
    %v328 = vpop.permute.xlu0 %327
    %330 = vset.pattern.permute.xlu0 6
    %331 = vperm.xlu0 %330, %v46
    %v332 = vpop.permute.xlu0 %331
    %v334 = vlaneseq
    %v335 = vshrl.u32 %v334, 7
    %v336 = vsub.s32 6, %v335
    %v337 = vrot.slane %v182, %v336
    %v338 = vlaneseq
    %v339 = vshrl.u32 %v338, 7
    %v340 = vsub.s32 6, %v339
    %v341 = vrot.slane %v183, %v340
    %v342 = vmul.f32 %v328, %v337
    %v343 = vmul.f32 %v328, %v341
    %v344 = vmul.f32 %v332, %v337
    %v345 = vmul.f32 %v332, %v341
    %v346 = vadd.f32 %v322, %v342
    %v347 = vadd.f32 %v323, %v343
    %v348 = vadd.f32 %v324, %v344
    %v349 = vadd.f32 %v325, %v345
    %350 = vset.pattern.permute.xlu0 7
    %351 = vperm.xlu0 %350, %v45
    %v352 = vpop.permute.xlu0 %351
    %354 = vset.pattern.permute.xlu0 7
    %355 = vperm.xlu0 %354, %v46
    %v356 = vpop.permute.xlu0 %355
    %v358 = vlaneseq
    %v359 = vshrl.u32 %v358, 7
    %v360 = vsub.s32 7, %v359
    %v361 = vrot.slane %v182, %v360
    %v362 = vlaneseq
    %v363 = vshrl.u32 %v362, 7
    %v364 = vsub.s32 7, %v363
    %v365 = vrot.slane %v183, %v364
    %v366 = vmul.f32 %v352, %v361
    %v367 = vmul.f32 %v352, %v365
    %v368 = vmul.f32 %v356, %v361
    %v369 = vmul.f32 %v356, %v365
    %v370 = vadd.f32 %v346, %v366
    %v371 = vadd.f32 %v347, %v367
    %v372 = vadd.f32 %v348, %v368
    %v373 = vadd.f32 %v349, %v369
    %374 = vset.pattern.permute.xlu0 8
    %375 = vperm.xlu0 %374, %v45
    %v376 = vpop.permute.xlu0 %375
    %378 = vset.pattern.permute.xlu0 8
    %379 = vperm.xlu0 %378, %v46
    %v380 = vpop.permute.xlu0 %379
    %v382 = vlaneseq
    %v383 = vshrl.u32 %v382, 7
    %v384 = vsub.s32 4, %v383
    %v385 = vrot.slane %v40, %v384
    %v386 = vlaneseq
    %v387 = vshrl.u32 %v386, 7
    %v388 = vsub.s32 4, %v387
    %v389 = vrot.slane %v41, %v388
    %v390 = vmul.f32 %v376, %v385
    %v391 = vmul.f32 %v376, %v389
    %v392 = vmul.f32 %v380, %v385
    %v393 = vmul.f32 %v380, %v389
    %394 = vset.pattern.permute.xlu0 9
    %395 = vperm.xlu0 %394, %v45
    %v396 = vpop.permute.xlu0 %395
    %398 = vset.pattern.permute.xlu0 9
    %399 = vperm.xlu0 %398, %v46
    %v400 = vpop.permute.xlu0 %399
    %v402 = vlaneseq
    %v403 = vshrl.u32 %v402, 7
    %v404 = vsub.s32 5, %v403
    %v405 = vrot.slane %v40, %v404
    %v406 = vlaneseq
    %v407 = vshrl.u32 %v406, 7
    %v408 = vsub.s32 5, %v407
    %v409 = vrot.slane %v41, %v408
    %v410 = vmul.f32 %v396, %v405
    %v411 = vmul.f32 %v396, %v409
    %v412 = vmul.f32 %v400, %v405
    %v413 = vmul.f32 %v400, %v409
    %v414 = vadd.f32 %v390, %v410
    %v415 = vadd.f32 %v391, %v411
    %v416 = vadd.f32 %v392, %v412
    %v417 = vadd.f32 %v393, %v413
    %418 = vset.pattern.permute.xlu0 10
    %419 = vperm.xlu0 %418, %v45
    %v420 = vpop.permute.xlu0 %419
    %422 = vset.pattern.permute.xlu0 10
    %423 = vperm.xlu0 %422, %v46
    %v424 = vpop.permute.xlu0 %423
    %v426 = vlaneseq
    %v427 = vshrl.u32 %v426, 7
    %v428 = vsub.s32 6, %v427
    %v429 = vrot.slane %v40, %v428
    %v430 = vlaneseq
    %v431 = vshrl.u32 %v430, 7
    %v432 = vsub.s32 6, %v431
    %v433 = vrot.slane %v41, %v432
    %v434 = vmul.f32 %v420, %v429
    %v435 = vmul.f32 %v420, %v433
    %v436 = vmul.f32 %v424, %v429
    %v437 = vmul.f32 %v424, %v433
    %v438 = vadd.f32 %v414, %v434
    %v439 = vadd.f32 %v415, %v435
    %v440 = vadd.f32 %v416, %v436
    %v441 = vadd.f32 %v417, %v437
    %442 = vset.pattern.permute.xlu0 11
    %443 = vperm.xlu0 %442, %v45
    %v444 = vpop.permute.xlu0 %443
    %446 = vset.pattern.permute.xlu0 11
    %447 = vperm.xlu0 %446, %v46
    %v448 = vpop.permute.xlu0 %447
    %v450 = vlaneseq
    %v451 = vshrl.u32 %v450, 7
    %v452 = vsub.s32 7, %v451
    %v453 = vrot.slane %v40, %v452
    %v454 = vlaneseq
    %v455 = vshrl.u32 %v454, 7
    %v456 = vsub.s32 7, %v455
    %v457 = vrot.slane %v41, %v456
    %v458 = vmul.f32 %v444, %v453
    %v459 = vmul.f32 %v444, %v457
    %v460 = vmul.f32 %v448, %v453
    %v461 = vmul.f32 %v448, %v457
    %v462 = vadd.f32 %v438, %v458
    %v463 = vadd.f32 %v439, %v459
    %v464 = vadd.f32 %v440, %v460
    %v465 = vadd.f32 %v441, %v461
    %v466 = vadd.f32 %v370, %v462
    %v467 = vadd.f32 %v371, %v463
    %v468 = vadd.f32 %v372, %v464
    %v469 = vadd.f32 %v373, %v465
    %v470 = vlaneseq
    %v471 = vshrl.u32 %v470, 7
    %v472 = vsub.s32 0, %v471
    %v473 = vrot.slane %v40, %v472
    %v474 = vlaneseq
    %v475 = vshrl.u32 %v474, 7
    %v476 = vsub.s32 0, %v475
    %v477 = vrot.slane %v41, %v476
    %v478 = vsub.f32 %v40, %v473
    %v479 = vsub.f32 %v41, %v477
    %v480 = vand.u32 2147483647, %v478
    %vm481 = vcmp.le.f32.partialorder %v480, 0.7853982
    %vm482 = vcmp.lt.s32.totalorder %v478, 0
    %v483 = vand.u32 %v478, 2139095040
    %v484 = vshrl.u32 %v483, 23
    %v485 = vsub.s32 %v484, 127
    %v486 = vand.u32 2147483647, %v478
    %v487 = vand.u32 %v486, 8388607
    %v488 = vor.u32 %v487, 8388608
    %v489 = vsub.s32 0, %v488
    %v490 = vadd.s32 %v485, 1
    %vm491 = vcmp.gt.s32.totalorder %v490, 0
    %v492 = vsel %vm491, %v490, 0
    %v493 = vshrl.u32 %v492, 5
    %v494 = vand.u32 %v492, 31
    %v495 = vsub.s32 32, %v494
    %v496 = vshrl.u32 683565275, %v495
    %v497 = vshll.u32 683565275, %v494
    %v498 = vshrl.u32 2475754826, %v495
    %v499 = vor.u32 %v497, %v498
    %v500 = vshll.u32 2475754826, %v494
    %v501 = vshrl.u32 2131351028, %v495
    %v502 = vor.u32 %v500, %v501
    %v503 = vshll.u32 2131351028, %v494
    %v504 = vshrl.u32 2102212464, %v495
    %v505 = vor.u32 %v503, %v504
    %v506 = vshll.u32 2102212464, %v494
    %v507 = vshrl.u32 920167782, %v495
    %v508 = vor.u32 %v506, %v507
    %v509 = vshll.u32 920167782, %v494
    %v510 = vshrl.u32 1326507024, %v495
    %v511 = vor.u32 %v509, %v510
    %vm512 = vcmp.lt.s32.totalorder %v493, 1
    %vm513 = vcmp.lt.s32.totalorder %v493, 2
    %vm514 = vcmp.lt.s32.totalorder %v493, 3
    %vm515 = vcmp.lt.s32.totalorder %v493, 4
    %v516 = vsel %vm512, %v496, %v499
    %v517 = vsel %vm515, %v505, 2102212464
    %v518 = vsel %vm514, %v502, %v517
    %v519 = vsel %vm513, %v516, %v518
    %v520 = vsel %vm512, %v499, %v502
    %v521 = vsel %vm515, %v508, 920167782
    %v522 = vsel %vm514, %v505, %v521
    %v523 = vsel %vm513, %v520, %v522
    %v524 = vsel %vm512, %v502, %v505
    %v525 = vsel %vm515, %v511, 1326507024
    %v526 = vsel %vm514, %v508, %v525
    %v527 = vsel %vm513, %v524, %v526
    %v528 = vshll.u32 %v488, 8
    %v529 = vmul.u32.u64.compose %v528, %v527
    %v530 = vextract.low.u32 %v529
    %v531 = vextract.high.u32 %v529
    %v532 = vmul.u32.u64.compose %v528, %v523
    %v533 = vextract.low.u32 %v532
    %v534 = vextract.high.u32 %v532
    %v535 = vmul.u32 %v528, %v519
    %v536 = vadd.s32 %v531, %v533
    %vm537 = vc.u32 %v531, %v533
    %v538 = vadd.s32 %v534, 1
    %v539 = vsel %vm537, %v538, %v534
    %v540 = vadd.s32 %v535, %v539
    %v541 = vadd.s32 %v540, 536870912
    %v542 = vshrl.u32 %v541, 30
    %v543 = vshll.u32 %v542, 30
    %v544 = vsub.s32 %v540, %v543
    %vm545 = vcmp.lt.s32.totalorder %v544, 0
    %v546 = vsub.s32 0, %v544
    %v547 = vsel %vm545, %v546, %v544
    %v548 = vclz %v547
    %v549 = vsub.s32 %v548, 2
    %vm550 = vcmp.gt.s32.totalorder 0, %v549
    %v551 = vsel %vm550, 0, %v549
    %v552 = vsub.s32 32, %v551
    %v553 = vshll.u32 %v544, %v551
    %v554 = vshrl.u32 %v536, %v552
    %v555 = vor.u32 %v553, %v554
    %v556 = vsub.s32 4294967266, %v551
    %v557 = vadd.s32 %v556, 127
    %v558 = vshll.u32 %v557, 23
    %v559 = vor.u32 4788187, %v558
    %v560 = vand.u32 2147483647, %v559
    %v562 = vcvt.s32.f32 %v555
    %v563 = vmul.f32 %v562, %v560
    %v564 = vxor.u32 %v563, 2147483648
    %v565 = vsel %vm482, %v564, %v563
    %v566 = vsub.s32 4, %v542
    %v567 = vsel %vm482, %v566, %v542
    %v568 = vsel %vm481, %v478, %v565
    %v569 = vsel %vm481, 0, %v567
    %v570 = vcosq.f32.pop %v568
    %v571 = vsinq.f32.pop %v568
    %vm572 = vweird.f32 %v478
    %v573 = vand.u32 %v569, 3
    %vm574 = vcmp.lt.s32.totalorder %v573, 2
    %vm575 = vcmp.eq.s32.totalorder %v573, 0
    %v576 = vxor.u32 %v571, 2147483648
    %v577 = vsel %vm575, %v570, %v576
    %vm578 = vcmp.eq.s32.totalorder %v573, 2
    %v579 = vxor.u32 %v570, 2147483648
    %v580 = vsel %vm578, %v579, %v571
    %v581 = vsel %vm574, %v577, %v580
    %v582 = vsel %vm572, nan, %v581
    %v583 = vand.u32 2147483647, %v479
    %vm584 = vcmp.le.f32.partialorder %v583, 0.7853982
    %vm585 = vcmp.lt.s32.totalorder %v479, 0
    %v586 = vand.u32 %v479, 2139095040
    %v587 = vshrl.u32 %v586, 23
    %v588 = vsub.s32 %v587, 127
    %v589 = vand.u32 2147483647, %v479
    %v590 = vand.u32 %v589, 8388607
    %v591 = vor.u32 %v590, 8388608
    %v592 = vsub.s32 0, %v591
    %v593 = vadd.s32 %v588, 1
    %vm594 = vcmp.gt.s32.totalorder %v593, 0
    %v595 = vsel %vm594, %v593, 0
    %v596 = vshrl.u32 %v595, 5
    %v597 = vand.u32 %v595, 31
    %v598 = vsub.s32 32, %v597
    %v599 = vshrl.u32 683565275, %v598
    %v600 = vshll.u32 683565275, %v597
    %v601 = vshrl.u32 2475754826, %v598
    %v602 = vor.u32 %v600, %v601
    %v603 = vshll.u32 2475754826, %v597
    %v604 = vshrl.u32 2131351028, %v598
    %v605 = vor.u32 %v603, %v604
    %v606 = vshll.u32 2131351028, %v597
    %v607 = vshrl.u32 2102212464, %v598
    %v608 = vor.u32 %v606, %v607
    %v609 = vshll.u32 2102212464, %v597
    %v610 = vshrl.u32 920167782, %v598
    %v611 = vor.u32 %v609, %v610
    %v612 = vshll.u32 920167782, %v597
    %v613 = vshrl.u32 1326507024, %v598
    %v614 = vor.u32 %v612, %v613
    %vm615 = vcmp.lt.s32.totalorder %v596, 1
    %vm616 = vcmp.lt.s32.totalorder %v596, 2
    %vm617 = vcmp.lt.s32.totalorder %v596, 3
    %vm618 = vcmp.lt.s32.totalorder %v596, 4
    %v619 = vsel %vm615, %v599, %v602
    %v620 = vsel %vm618, %v608, 2102212464
    %v621 = vsel %vm617, %v605, %v620
    %v622 = vsel %vm616, %v619, %v621
    %v623 = vsel %vm615, %v602, %v605
    %v624 = vsel %vm618, %v611, 920167782
    %v625 = vsel %vm617, %v608, %v624
    %v626 = vsel %vm616, %v623, %v625
    %v627 = vsel %vm615, %v605, %v608
    %v628 = vsel %vm618, %v614, 1326507024
    %v629 = vsel %vm617, %v611, %v628
    %v630 = vsel %vm616, %v627, %v629
    %v631 = vshll.u32 %v591, 8
    %v632 = vmul.u32.u64.compose %v631, %v630
    %v633 = vextract.low.u32 %v632
    %v634 = vextract.high.u32 %v632
    %v635 = vmul.u32.u64.compose %v631, %v626
    %v636 = vextract.low.u32 %v635
    %v637 = vextract.high.u32 %v635
    %v638 = vmul.u32 %v631, %v622
    %v639 = vadd.s32 %v634, %v636
    %vm640 = vc.u32 %v634, %v636
    %v641 = vadd.s32 %v637, 1
    %v642 = vsel %vm640, %v641, %v637
    %v643 = vadd.s32 %v638, %v642
    %v644 = vadd.s32 %v643, 536870912
    %v645 = vshrl.u32 %v644, 30
    %v646 = vshll.u32 %v645, 30
    %v647 = vsub.s32 %v643, %v646
    %vm648 = vcmp.lt.s32.totalorder %v647, 0
    %v649 = vsub.s32 0, %v647
    %v650 = vsel %vm648, %v649, %v647
    %v651 = vclz %v650
    %v652 = vsub.s32 %v651, 2
    %vm653 = vcmp.gt.s32.totalorder 0, %v652
    %v654 = vsel %vm653, 0, %v652
    %v655 = vsub.s32 32, %v654
    %v656 = vshll.u32 %v647, %v654
    %v657 = vshrl.u32 %v639, %v655
    %v658 = vor.u32 %v656, %v657
    %v659 = vsub.s32 4294967266, %v654
    %v660 = vadd.s32 %v659, 127
    %v661 = vshll.u32 %v660, 23
    %v662 = vor.u32 4788187, %v661
    %v663 = vand.u32 2147483647, %v662
    %v665 = vcvt.s32.f32 %v658
    %v666 = vmul.f32 %v665, %v663
    %v667 = vxor.u32 %v666, 2147483648
    %v668 = vsel %vm585, %v667, %v666
    %v669 = vsub.s32 4, %v645
    %v670 = vsel %vm585, %v669, %v645
    %v671 = vsel %vm584, %v479, %v668
    %v672 = vsel %vm584, 0, %v670
    %v673 = vcosq.f32.pop %v671
    %v674 = vsinq.f32.pop %v671
    %vm675 = vweird.f32 %v479
    %v676 = vand.u32 %v672, 3
    %vm677 = vcmp.lt.s32.totalorder %v676, 2
    %vm678 = vcmp.eq.s32.totalorder %v676, 0
    %v679 = vxor.u32 %v674, 2147483648
    %v680 = vsel %vm678, %v673, %v679
    %vm681 = vcmp.eq.s32.totalorder %v676, 2
    %v682 = vxor.u32 %v673, 2147483648
    %v683 = vsel %vm681, %v682, %v674
    %v684 = vsel %vm677, %v680, %v683
    %v685 = vsel %vm675, nan, %v684
    %v688 = vrot.slane %v582, 4
    %v689 = vrot.slane %v685, 4
    %v692 = vmul.f32 %v192, %v688
    %v693 = vmul.f32 %v192, %v689
    %v694 = vsub.f32 %v40, %v385
    %v695 = vsub.f32 %v41, %v389
    %v696 = vmul.f32 %v692, %v694
    %v697 = vmul.f32 %v693, %v695
    %v698 = vlaneseq
    %v699 = vshrl.u32 %v698, 7
    %v700 = vsub.s32 1, %v699
    %v701 = vrot.slane %v40, %v700
    %v702 = vlaneseq
    %v703 = vshrl.u32 %v702, 7
    %v704 = vsub.s32 1, %v703
    %v705 = vrot.slane %v41, %v704
    %v706 = vsub.f32 %v40, %v701
    %v707 = vsub.f32 %v41, %v705
    %v708 = vand.u32 2147483647, %v706
    %vm709 = vcmp.le.f32.partialorder %v708, 0.7853982
    %vm710 = vcmp.lt.s32.totalorder %v706, 0
    %v711 = vand.u32 %v706, 2139095040
    %v712 = vshrl.u32 %v711, 23
    %v713 = vsub.s32 %v712, 127
    %v714 = vand.u32 2147483647, %v706
    %v715 = vand.u32 %v714, 8388607
    %v716 = vor.u32 %v715, 8388608
    %v717 = vsub.s32 0, %v716
    %v718 = vadd.s32 %v713, 1
    %vm719 = vcmp.gt.s32.totalorder %v718, 0
    %v720 = vsel %vm719, %v718, 0
    %v721 = vshrl.u32 %v720, 5
    %v722 = vand.u32 %v720, 31
    %v723 = vsub.s32 32, %v722
    %v724 = vshrl.u32 683565275, %v723
    %v725 = vshll.u32 683565275, %v722
    %v726 = vshrl.u32 2475754826, %v723
    %v727 = vor.u32 %v725, %v726
    %v728 = vshll.u32 2475754826, %v722
    %v729 = vshrl.u32 2131351028, %v723
    %v730 = vor.u32 %v728, %v729
    %v731 = vshll.u32 2131351028, %v722
    %v732 = vshrl.u32 2102212464, %v723
    %v733 = vor.u32 %v731, %v732
    %v734 = vshll.u32 2102212464, %v722
    %v735 = vshrl.u32 920167782, %v723
    %v736 = vor.u32 %v734, %v735
    %v737 = vshll.u32 920167782, %v722
    %v738 = vshrl.u32 1326507024, %v723
    %v739 = vor.u32 %v737, %v738
    %vm740 = vcmp.lt.s32.totalorder %v721, 1
    %vm741 = vcmp.lt.s32.totalorder %v721, 2
    %vm742 = vcmp.lt.s32.totalorder %v721, 3
    %vm743 = vcmp.lt.s32.totalorder %v721, 4
    %v744 = vsel %vm740, %v724, %v727
    %v745 = vsel %vm743, %v733, 2102212464
    %v746 = vsel %vm742, %v730, %v745
    %v747 = vsel %vm741, %v744, %v746
    %v748 = vsel %vm740, %v727, %v730
    %v749 = vsel %vm743, %v736, 920167782
    %v750 = vsel %vm742, %v733, %v749
    %v751 = vsel %vm741, %v748, %v750
    %v752 = vsel %vm740, %v730, %v733
    %v753 = vsel %vm743, %v739, 1326507024
    %v754 = vsel %vm742, %v736, %v753
    %v755 = vsel %vm741, %v752, %v754
    %v756 = vshll.u32 %v716, 8
    %v757 = vmul.u32.u64.compose %v756, %v755
    %v758 = vextract.low.u32 %v757
    %v759 = vextract.high.u32 %v757
    %v760 = vmul.u32.u64.compose %v756, %v751
    %v761 = vextract.low.u32 %v760
    %v762 = vextract.high.u32 %v760
    %v763 = vmul.u32 %v756, %v747
    %v764 = vadd.s32 %v759, %v761
    %vm765 = vc.u32 %v759, %v761
    %v766 = vadd.s32 %v762, 1
    %v767 = vsel %vm765, %v766, %v762
    %v768 = vadd.s32 %v763, %v767
    %v769 = vadd.s32 %v768, 536870912
    %v770 = vshrl.u32 %v769, 30
    %v771 = vshll.u32 %v770, 30
    %v772 = vsub.s32 %v768, %v771
    %vm773 = vcmp.lt.s32.totalorder %v772, 0
    %v774 = vsub.s32 0, %v772
    %v775 = vsel %vm773, %v774, %v772
    %v776 = vclz %v775
    %v777 = vsub.s32 %v776, 2
    %vm778 = vcmp.gt.s32.totalorder 0, %v777
    %v779 = vsel %vm778, 0, %v777
    %v780 = vsub.s32 32, %v779
    %v781 = vshll.u32 %v772, %v779
    %v782 = vshrl.u32 %v764, %v780
    %v783 = vor.u32 %v781, %v782
    %v784 = vsub.s32 4294967266, %v779
    %v785 = vadd.s32 %v784, 127
    %v786 = vshll.u32 %v785, 23
    %v787 = vor.u32 4788187, %v786
    %v788 = vand.u32 2147483647, %v787
    %v790 = vcvt.s32.f32 %v783
    %v791 = vmul.f32 %v790, %v788
    %v792 = vxor.u32 %v791, 2147483648
    %v793 = vsel %vm710, %v792, %v791
    %v794 = vsub.s32 4, %v770
    %v795 = vsel %vm710, %v794, %v770
    %v796 = vsel %vm709, %v706, %v793
    %v797 = vsel %vm709, 0, %v795
    %v798 = vcosq.f32.pop %v796
    %v799 = vsinq.f32.pop %v796
    %vm800 = vweird.f32 %v706
    %v801 = vand.u32 %v797, 3
    %vm802 = vcmp.lt.s32.totalorder %v801, 2
    %vm803 = vcmp.eq.s32.totalorder %v801, 0
    %v804 = vxor.u32 %v799, 2147483648
    %v805 = vsel %vm803, %v798, %v804
    %vm806 = vcmp.eq.s32.totalorder %v801, 2
    %v807 = vxor.u32 %v798, 2147483648
    %v808 = vsel %vm806, %v807, %v799
    %v809 = vsel %vm802, %v805, %v808
    %v810 = vsel %vm800, nan, %v809
    %v811 = vand.u32 2147483647, %v707
    %vm812 = vcmp.le.f32.partialorder %v811, 0.7853982
    %vm813 = vcmp.lt.s32.totalorder %v707, 0
    %v814 = vand.u32 %v707, 2139095040
    %v815 = vshrl.u32 %v814, 23
    %v816 = vsub.s32 %v815, 127
    %v817 = vand.u32 2147483647, %v707
    %v818 = vand.u32 %v817, 8388607
    %v819 = vor.u32 %v818, 8388608
    %v820 = vsub.s32 0, %v819
    %v821 = vadd.s32 %v816, 1
    %vm822 = vcmp.gt.s32.totalorder %v821, 0
    %v823 = vsel %vm822, %v821, 0
    %v824 = vshrl.u32 %v823, 5
    %v825 = vand.u32 %v823, 31
    %v826 = vsub.s32 32, %v825
    %v827 = vshrl.u32 683565275, %v826
    %v828 = vshll.u32 683565275, %v825
    %v829 = vshrl.u32 2475754826, %v826
    %v830 = vor.u32 %v828, %v829
    %v831 = vshll.u32 2475754826, %v825
    %v832 = vshrl.u32 2131351028, %v826
    %v833 = vor.u32 %v831, %v832
    %v834 = vshll.u32 2131351028, %v825
    %v835 = vshrl.u32 2102212464, %v826
    %v836 = vor.u32 %v834, %v835
    %v837 = vshll.u32 2102212464, %v825
    %v838 = vshrl.u32 920167782, %v826
    %v839 = vor.u32 %v837, %v838
    %v840 = vshll.u32 920167782, %v825
    %v841 = vshrl.u32 1326507024, %v826
    %v842 = vor.u32 %v840, %v841
    %vm843 = vcmp.lt.s32.totalorder %v824, 1
    %vm844 = vcmp.lt.s32.totalorder %v824, 2
    %vm845 = vcmp.lt.s32.totalorder %v824, 3
    %vm846 = vcmp.lt.s32.totalorder %v824, 4
    %v847 = vsel %vm843, %v827, %v830
    %v848 = vsel %vm846, %v836, 2102212464
    %v849 = vsel %vm845, %v833, %v848
    %v850 = vsel %vm844, %v847, %v849
    %v851 = vsel %vm843, %v830, %v833
    %v852 = vsel %vm846, %v839, 920167782
    %v853 = vsel %vm845, %v836, %v852
    %v854 = vsel %vm844, %v851, %v853
    %v855 = vsel %vm843, %v833, %v836
    %v856 = vsel %vm846, %v842, 1326507024
    %v857 = vsel %vm845, %v839, %v856
    %v858 = vsel %vm844, %v855, %v857
    %v859 = vshll.u32 %v819, 8
    %v860 = vmul.u32.u64.compose %v859, %v858
    %v861 = vextract.low.u32 %v860
    %v862 = vextract.high.u32 %v860
    %v863 = vmul.u32.u64.compose %v859, %v854
    %v864 = vextract.low.u32 %v863
    %v865 = vextract.high.u32 %v863
    %v866 = vmul.u32 %v859, %v850
    %v867 = vadd.s32 %v862, %v864
    %vm868 = vc.u32 %v862, %v864
    %v869 = vadd.s32 %v865, 1
    %v870 = vsel %vm868, %v869, %v865
    %v871 = vadd.s32 %v866, %v870
    %v872 = vadd.s32 %v871, 536870912
    %v873 = vshrl.u32 %v872, 30
    %v874 = vshll.u32 %v873, 30
    %v875 = vsub.s32 %v871, %v874
    %vm876 = vcmp.lt.s32.totalorder %v875, 0
    %v877 = vsub.s32 0, %v875
    %v878 = vsel %vm876, %v877, %v875
    %v879 = vclz %v878
    %v880 = vsub.s32 %v879, 2
    %vm881 = vcmp.gt.s32.totalorder 0, %v880
    %v882 = vsel %vm881, 0, %v880
    %v883 = vsub.s32 32, %v882
    %v884 = vshll.u32 %v875, %v882
    %v885 = vshrl.u32 %v867, %v883
    %v886 = vor.u32 %v884, %v885
    %v887 = vsub.s32 4294967266, %v882
    %v888 = vadd.s32 %v887, 127
    %v889 = vshll.u32 %v888, 23
    %v890 = vor.u32 4788187, %v889
    %v891 = vand.u32 2147483647, %v890
    %v893 = vcvt.s32.f32 %v886
    %v894 = vmul.f32 %v893, %v891
    %v895 = vxor.u32 %v894, 2147483648
    %v896 = vsel %vm813, %v895, %v894
    %v897 = vsub.s32 4, %v873
    %v898 = vsel %vm813, %v897, %v873
    %v899 = vsel %vm812, %v707, %v896
    %v900 = vsel %vm812, 0, %v898
    %v901 = vcosq.f32.pop %v899
    %v902 = vsinq.f32.pop %v899
    %vm903 = vweird.f32 %v707
    %v904 = vand.u32 %v900, 3
    %vm905 = vcmp.lt.s32.totalorder %v904, 2
    %vm906 = vcmp.eq.s32.totalorder %v904, 0
    %v907 = vxor.u32 %v902, 2147483648
    %v908 = vsel %vm906, %v901, %v907
    %vm909 = vcmp.eq.s32.totalorder %v904, 2
    %v910 = vxor.u32 %v901, 2147483648
    %v911 = vsel %vm909, %v910, %v902
    %v912 = vsel %vm905, %v908, %v911
    %v913 = vsel %vm903, nan, %v912
    %v916 = vrot.slane %v810, 4
    %v917 = vrot.slane %v913, 4
    %v920 = vmul.f32 %v212, %v916
    %v921 = vmul.f32 %v212, %v917
    %v922 = vsub.f32 %v40, %v405
    %v923 = vsub.f32 %v41, %v409
    %v924 = vmul.f32 %v920, %v922
    %v925 = vmul.f32 %v921, %v923
    %v926 = vadd.f32 %v696, %v924
    %v927 = vadd.f32 %v697, %v925
    %v928 = vlaneseq
    %v929 = vshrl.u32 %v928, 7
    %v930 = vsub.s32 2, %v929
    %v931 = vrot.slane %v40, %v930
    %v932 = vlaneseq
    %v933 = vshrl.u32 %v932, 7
    %v934 = vsub.s32 2, %v933
    %v935 = vrot.slane %v41, %v934
    %v936 = vsub.f32 %v40, %v931
    %v937 = vsub.f32 %v41, %v935
    %v938 = vand.u32 2147483647, %v936
    %vm939 = vcmp.le.f32.partialorder %v938, 0.7853982
    %vm940 = vcmp.lt.s32.totalorder %v936, 0
    %v941 = vand.u32 %v936, 2139095040
    %v942 = vshrl.u32 %v941, 23
    %v943 = vsub.s32 %v942, 127
    %v944 = vand.u32 2147483647, %v936
    %v945 = vand.u32 %v944, 8388607
    %v946 = vor.u32 %v945, 8388608
    %v947 = vsub.s32 0, %v946
    %v948 = vadd.s32 %v943, 1
    %vm949 = vcmp.gt.s32.totalorder %v948, 0
    %v950 = vsel %vm949, %v948, 0
    %v951 = vshrl.u32 %v950, 5
    %v952 = vand.u32 %v950, 31
    %v953 = vsub.s32 32, %v952
    %v954 = vshrl.u32 683565275, %v953
    %v955 = vshll.u32 683565275, %v952
    %v956 = vshrl.u32 2475754826, %v953
    %v957 = vor.u32 %v955, %v956
    %v958 = vshll.u32 2475754826, %v952
    %v959 = vshrl.u32 2131351028, %v953
    %v960 = vor.u32 %v958, %v959
    %v961 = vshll.u32 2131351028, %v952
    %v962 = vshrl.u32 2102212464, %v953
    %v963 = vor.u32 %v961, %v962
    %v964 = vshll.u32 2102212464, %v952
    %v965 = vshrl.u32 920167782, %v953
    %v966 = vor.u32 %v964, %v965
    %v967 = vshll.u32 920167782, %v952
    %v968 = vshrl.u32 1326507024, %v953
    %v969 = vor.u32 %v967, %v968
    %vm970 = vcmp.lt.s32.totalorder %v951, 1
    %vm971 = vcmp.lt.s32.totalorder %v951, 2
    %vm972 = vcmp.lt.s32.totalorder %v951, 3
    %vm973 = vcmp.lt.s32.totalorder %v951, 4
    %v974 = vsel %vm970, %v954, %v957
    %v975 = vsel %vm973, %v963, 2102212464
    %v976 = vsel %vm972, %v960, %v975
    %v977 = vsel %vm971, %v974, %v976
    %v978 = vsel %vm970, %v957, %v960
    %v979 = vsel %vm973, %v966, 920167782
    %v980 = vsel %vm972, %v963, %v979
    %v981 = vsel %vm971, %v978, %v980
    %v982 = vsel %vm970, %v960, %v963
    %v983 = vsel %vm973, %v969, 1326507024
    %v984 = vsel %vm972, %v966, %v983
    %v985 = vsel %vm971, %v982, %v984
    %v986 = vshll.u32 %v946, 8
    %v987 = vmul.u32.u64.compose %v986, %v985
    %v988 = vextract.low.u32 %v987
    %v989 = vextract.high.u32 %v987
    %v990 = vmul.u32.u64.compose %v986, %v981
    %v991 = vextract.low.u32 %v990
    %v992 = vextract.high.u32 %v990
    %v993 = vmul.u32 %v986, %v977
    %v994 = vadd.s32 %v989, %v991
    %vm995 = vc.u32 %v989, %v991
    %v996 = vadd.s32 %v992, 1
    %v997 = vsel %vm995, %v996, %v992
    %v998 = vadd.s32 %v993, %v997
    %v999 = vadd.s32 %v998, 536870912
    %v1000 = vshrl.u32 %v999, 30
    %v1001 = vshll.u32 %v1000, 30
    %v1002 = vsub.s32 %v998, %v1001
    %vm1003 = vcmp.lt.s32.totalorder %v1002, 0
    %v1004 = vsub.s32 0, %v1002
    %v1005 = vsel %vm1003, %v1004, %v1002
    %v1006 = vclz %v1005
    %v1007 = vsub.s32 %v1006, 2
    %vm1008 = vcmp.gt.s32.totalorder 0, %v1007
    %v1009 = vsel %vm1008, 0, %v1007
    %v1010 = vsub.s32 32, %v1009
    %v1011 = vshll.u32 %v1002, %v1009
    %v1012 = vshrl.u32 %v994, %v1010
    %v1013 = vor.u32 %v1011, %v1012
    %v1014 = vsub.s32 4294967266, %v1009
    %v1015 = vadd.s32 %v1014, 127
    %v1016 = vshll.u32 %v1015, 23
    %v1017 = vor.u32 4788187, %v1016
    %v1018 = vand.u32 2147483647, %v1017
    %v1020 = vcvt.s32.f32 %v1013
    %v1021 = vmul.f32 %v1020, %v1018
    %v1022 = vxor.u32 %v1021, 2147483648
    %v1023 = vsel %vm940, %v1022, %v1021
    %v1024 = vsub.s32 4, %v1000
    %v1025 = vsel %vm940, %v1024, %v1000
    %v1026 = vsel %vm939, %v936, %v1023
    %v1027 = vsel %vm939, 0, %v1025
    %v1028 = vcosq.f32.pop %v1026
    %v1029 = vsinq.f32.pop %v1026
    %vm1030 = vweird.f32 %v936
    %v1031 = vand.u32 %v1027, 3
    %vm1032 = vcmp.lt.s32.totalorder %v1031, 2
    %vm1033 = vcmp.eq.s32.totalorder %v1031, 0
    %v1034 = vxor.u32 %v1029, 2147483648
    %v1035 = vsel %vm1033, %v1028, %v1034
    %vm1036 = vcmp.eq.s32.totalorder %v1031, 2
    %v1037 = vxor.u32 %v1028, 2147483648
    %v1038 = vsel %vm1036, %v1037, %v1029
    %v1039 = vsel %vm1032, %v1035, %v1038
    %v1040 = vsel %vm1030, nan, %v1039
    %v1041 = vand.u32 2147483647, %v937
    %vm1042 = vcmp.le.f32.partialorder %v1041, 0.7853982
    %vm1043 = vcmp.lt.s32.totalorder %v937, 0
    %v1044 = vand.u32 %v937, 2139095040
    %v1045 = vshrl.u32 %v1044, 23
    %v1046 = vsub.s32 %v1045, 127
    %v1047 = vand.u32 2147483647, %v937
    %v1048 = vand.u32 %v1047, 8388607
    %v1049 = vor.u32 %v1048, 8388608
    %v1050 = vsub.s32 0, %v1049
    %v1051 = vadd.s32 %v1046, 1
    %vm1052 = vcmp.gt.s32.totalorder %v1051, 0
    %v1053 = vsel %vm1052, %v1051, 0
    %v1054 = vshrl.u32 %v1053, 5
    %v1055 = vand.u32 %v1053, 31
    %v1056 = vsub.s32 32, %v1055
    %v1057 = vshrl.u32 683565275, %v1056
    %v1058 = vshll.u32 683565275, %v1055
    %v1059 = vshrl.u32 2475754826, %v1056
    %v1060 = vor.u32 %v1058, %v1059
    %v1061 = vshll.u32 2475754826, %v1055
    %v1062 = vshrl.u32 2131351028, %v1056
    %v1063 = vor.u32 %v1061, %v1062
    %v1064 = vshll.u32 2131351028, %v1055
    %v1065 = vshrl.u32 2102212464, %v1056
    %v1066 = vor.u32 %v1064, %v1065
    %v1067 = vshll.u32 2102212464, %v1055
    %v1068 = vshrl.u32 920167782, %v1056
    %v1069 = vor.u32 %v1067, %v1068
    %v1070 = vshll.u32 920167782, %v1055
    %v1071 = vshrl.u32 1326507024, %v1056
    %v1072 = vor.u32 %v1070, %v1071
    %vm1073 = vcmp.lt.s32.totalorder %v1054, 1
    %vm1074 = vcmp.lt.s32.totalorder %v1054, 2
    %vm1075 = vcmp.lt.s32.totalorder %v1054, 3
    %vm1076 = vcmp.lt.s32.totalorder %v1054, 4
    %v1077 = vsel %vm1073, %v1057, %v1060
    %v1078 = vsel %vm1076, %v1066, 2102212464
    %v1079 = vsel %vm1075, %v1063, %v1078
    %v1080 = vsel %vm1074, %v1077, %v1079
    %v1081 = vsel %vm1073, %v1060, %v1063
    %v1082 = vsel %vm1076, %v1069, 920167782
    %v1083 = vsel %vm1075, %v1066, %v1082
    %v1084 = vsel %vm1074, %v1081, %v1083
    %v1085 = vsel %vm1073, %v1063, %v1066
    %v1086 = vsel %vm1076, %v1072, 1326507024
    %v1087 = vsel %vm1075, %v1069, %v1086
    %v1088 = vsel %vm1074, %v1085, %v1087
    %v1089 = vshll.u32 %v1049, 8
    %v1090 = vmul.u32.u64.compose %v1089, %v1088
    %v1091 = vextract.low.u32 %v1090
    %v1092 = vextract.high.u32 %v1090
    %v1093 = vmul.u32.u64.compose %v1089, %v1084
    %v1094 = vextract.low.u32 %v1093
    %v1095 = vextract.high.u32 %v1093
    %v1096 = vmul.u32 %v1089, %v1080
    %v1097 = vadd.s32 %v1092, %v1094
    %vm1098 = vc.u32 %v1092, %v1094
    %v1099 = vadd.s32 %v1095, 1
    %v1100 = vsel %vm1098, %v1099, %v1095
    %v1101 = vadd.s32 %v1096, %v1100
    %v1102 = vadd.s32 %v1101, 536870912
    %v1103 = vshrl.u32 %v1102, 30
    %v1104 = vshll.u32 %v1103, 30
    %v1105 = vsub.s32 %v1101, %v1104
    %vm1106 = vcmp.lt.s32.totalorder %v1105, 0
    %v1107 = vsub.s32 0, %v1105
    %v1108 = vsel %vm1106, %v1107, %v1105
    %v1109 = vclz %v1108
    %v1110 = vsub.s32 %v1109, 2
    %vm1111 = vcmp.gt.s32.totalorder 0, %v1110
    %v1112 = vsel %vm1111, 0, %v1110
    %v1113 = vsub.s32 32, %v1112
    %v1114 = vshll.u32 %v1105, %v1112
    %v1115 = vshrl.u32 %v1097, %v1113
    %v1116 = vor.u32 %v1114, %v1115
    %v1117 = vsub.s32 4294967266, %v1112
    %v1118 = vadd.s32 %v1117, 127
    %v1119 = vshll.u32 %v1118, 23
    %v1120 = vor.u32 4788187, %v1119
    %v1121 = vand.u32 2147483647, %v1120
    %v1123 = vcvt.s32.f32 %v1116
    %v1124 = vmul.f32 %v1123, %v1121
    %v1125 = vxor.u32 %v1124, 2147483648
    %v1126 = vsel %vm1043, %v1125, %v1124
    %v1127 = vsub.s32 4, %v1103
    %v1128 = vsel %vm1043, %v1127, %v1103
    %v1129 = vsel %vm1042, %v937, %v1126
    %v1130 = vsel %vm1042, 0, %v1128
    %v1131 = vcosq.f32.pop %v1129
    %v1132 = vsinq.f32.pop %v1129
    %vm1133 = vweird.f32 %v937
    %v1134 = vand.u32 %v1130, 3
    %vm1135 = vcmp.lt.s32.totalorder %v1134, 2
    %vm1136 = vcmp.eq.s32.totalorder %v1134, 0
    %v1137 = vxor.u32 %v1132, 2147483648
    %v1138 = vsel %vm1136, %v1131, %v1137
    %vm1139 = vcmp.eq.s32.totalorder %v1134, 2
    %v1140 = vxor.u32 %v1131, 2147483648
    %v1141 = vsel %vm1139, %v1140, %v1132
    %v1142 = vsel %vm1135, %v1138, %v1141
    %v1143 = vsel %vm1133, nan, %v1142
    %v1146 = vrot.slane %v1040, 4
    %v1147 = vrot.slane %v1143, 4
    %v1150 = vmul.f32 %v236, %v1146
    %v1151 = vmul.f32 %v236, %v1147
    %v1152 = vsub.f32 %v40, %v429
    %v1153 = vsub.f32 %v41, %v433
    %v1154 = vmul.f32 %v1150, %v1152
    %v1155 = vmul.f32 %v1151, %v1153
    %v1156 = vadd.f32 %v926, %v1154
    %v1157 = vadd.f32 %v927, %v1155
    %v1158 = vlaneseq
    %v1159 = vshrl.u32 %v1158, 7
    %v1160 = vsub.s32 3, %v1159
    %v1161 = vrot.slane %v40, %v1160
    %v1162 = vlaneseq
    %v1163 = vshrl.u32 %v1162, 7
    %v1164 = vsub.s32 3, %v1163
    %v1165 = vrot.slane %v41, %v1164
    %v1166 = vsub.f32 %v40, %v1161
    %v1167 = vsub.f32 %v41, %v1165
    %v1168 = vand.u32 2147483647, %v1166
    %vm1169 = vcmp.le.f32.partialorder %v1168, 0.7853982
    %vm1170 = vcmp.lt.s32.totalorder %v1166, 0
    %v1171 = vand.u32 %v1166, 2139095040
    %v1172 = vshrl.u32 %v1171, 23
    %v1173 = vsub.s32 %v1172, 127
    %v1174 = vand.u32 2147483647, %v1166
    %v1175 = vand.u32 %v1174, 8388607
    %v1176 = vor.u32 %v1175, 8388608
    %v1177 = vsub.s32 0, %v1176
    %v1178 = vadd.s32 %v1173, 1
    %vm1179 = vcmp.gt.s32.totalorder %v1178, 0
    %v1180 = vsel %vm1179, %v1178, 0
    %v1181 = vshrl.u32 %v1180, 5
    %v1182 = vand.u32 %v1180, 31
    %v1183 = vsub.s32 32, %v1182
    %v1184 = vshrl.u32 683565275, %v1183
    %v1185 = vshll.u32 683565275, %v1182
    %v1186 = vshrl.u32 2475754826, %v1183
    %v1187 = vor.u32 %v1185, %v1186
    %v1188 = vshll.u32 2475754826, %v1182
    %v1189 = vshrl.u32 2131351028, %v1183
    %v1190 = vor.u32 %v1188, %v1189
    %v1191 = vshll.u32 2131351028, %v1182
    %v1192 = vshrl.u32 2102212464, %v1183
    %v1193 = vor.u32 %v1191, %v1192
    %v1194 = vshll.u32 2102212464, %v1182
    %v1195 = vshrl.u32 920167782, %v1183
    %v1196 = vor.u32 %v1194, %v1195
    %v1197 = vshll.u32 920167782, %v1182
    %v1198 = vshrl.u32 1326507024, %v1183
    %v1199 = vor.u32 %v1197, %v1198
    %vm1200 = vcmp.lt.s32.totalorder %v1181, 1
    %vm1201 = vcmp.lt.s32.totalorder %v1181, 2
    %vm1202 = vcmp.lt.s32.totalorder %v1181, 3
    %vm1203 = vcmp.lt.s32.totalorder %v1181, 4
    %v1204 = vsel %vm1200, %v1184, %v1187
    %v1205 = vsel %vm1203, %v1193, 2102212464
    %v1206 = vsel %vm1202, %v1190, %v1205
    %v1207 = vsel %vm1201, %v1204, %v1206
    %v1208 = vsel %vm1200, %v1187, %v1190
    %v1209 = vsel %vm1203, %v1196, 920167782
    %v1210 = vsel %vm1202, %v1193, %v1209
    %v1211 = vsel %vm1201, %v1208, %v1210
    %v1212 = vsel %vm1200, %v1190, %v1193
    %v1213 = vsel %vm1203, %v1199, 1326507024
    %v1214 = vsel %vm1202, %v1196, %v1213
    %v1215 = vsel %vm1201, %v1212, %v1214
    %v1216 = vshll.u32 %v1176, 8
    %v1217 = vmul.u32.u64.compose %v1216, %v1215
    %v1218 = vextract.low.u32 %v1217
    %v1219 = vextract.high.u32 %v1217
    %v1220 = vmul.u32.u64.compose %v1216, %v1211
    %v1221 = vextract.low.u32 %v1220
    %v1222 = vextract.high.u32 %v1220
    %v1223 = vmul.u32 %v1216, %v1207
    %v1224 = vadd.s32 %v1219, %v1221
    %vm1225 = vc.u32 %v1219, %v1221
    %v1226 = vadd.s32 %v1222, 1
    %v1227 = vsel %vm1225, %v1226, %v1222
    %v1228 = vadd.s32 %v1223, %v1227
    %v1229 = vadd.s32 %v1228, 536870912
    %v1230 = vshrl.u32 %v1229, 30
    %v1231 = vshll.u32 %v1230, 30
    %v1232 = vsub.s32 %v1228, %v1231
    %vm1233 = vcmp.lt.s32.totalorder %v1232, 0
    %v1234 = vsub.s32 0, %v1232
    %v1235 = vsel %vm1233, %v1234, %v1232
    %v1236 = vclz %v1235
    %v1237 = vsub.s32 %v1236, 2
    %vm1238 = vcmp.gt.s32.totalorder 0, %v1237
    %v1239 = vsel %vm1238, 0, %v1237
    %v1240 = vsub.s32 32, %v1239
    %v1241 = vshll.u32 %v1232, %v1239
    %v1242 = vshrl.u32 %v1224, %v1240
    %v1243 = vor.u32 %v1241, %v1242
    %v1244 = vsub.s32 4294967266, %v1239
    %v1245 = vadd.s32 %v1244, 127
    %v1246 = vshll.u32 %v1245, 23
    %v1247 = vor.u32 4788187, %v1246
    %v1248 = vand.u32 2147483647, %v1247
    %v1250 = vcvt.s32.f32 %v1243
    %v1251 = vmul.f32 %v1250, %v1248
    %v1252 = vxor.u32 %v1251, 2147483648
    %v1253 = vsel %vm1170, %v1252, %v1251
    %v1254 = vsub.s32 4, %v1230
    %v1255 = vsel %vm1170, %v1254, %v1230
    %v1256 = vsel %vm1169, %v1166, %v1253
    %v1257 = vsel %vm1169, 0, %v1255
    %v1258 = vcosq.f32.pop %v1256
    %v1259 = vsinq.f32.pop %v1256
    %vm1260 = vweird.f32 %v1166
    %v1261 = vand.u32 %v1257, 3
    %vm1262 = vcmp.lt.s32.totalorder %v1261, 2
    %vm1263 = vcmp.eq.s32.totalorder %v1261, 0
    %v1264 = vxor.u32 %v1259, 2147483648
    %v1265 = vsel %vm1263, %v1258, %v1264
    %vm1266 = vcmp.eq.s32.totalorder %v1261, 2
    %v1267 = vxor.u32 %v1258, 2147483648
    %v1268 = vsel %vm1266, %v1267, %v1259
    %v1269 = vsel %vm1262, %v1265, %v1268
    %v1270 = vsel %vm1260, nan, %v1269
    %v1271 = vand.u32 2147483647, %v1167
    %vm1272 = vcmp.le.f32.partialorder %v1271, 0.7853982
    %vm1273 = vcmp.lt.s32.totalorder %v1167, 0
    %v1274 = vand.u32 %v1167, 2139095040
    %v1275 = vshrl.u32 %v1274, 23
    %v1276 = vsub.s32 %v1275, 127
    %v1277 = vand.u32 2147483647, %v1167
    %v1278 = vand.u32 %v1277, 8388607
    %v1279 = vor.u32 %v1278, 8388608
    %v1280 = vsub.s32 0, %v1279
    %v1281 = vadd.s32 %v1276, 1
    %vm1282 = vcmp.gt.s32.totalorder %v1281, 0
    %v1283 = vsel %vm1282, %v1281, 0
    %v1284 = vshrl.u32 %v1283, 5
    %v1285 = vand.u32 %v1283, 31
    %v1286 = vsub.s32 32, %v1285
    %v1287 = vshrl.u32 683565275, %v1286
    %v1288 = vshll.u32 683565275, %v1285
    %v1289 = vshrl.u32 2475754826, %v1286
    %v1290 = vor.u32 %v1288, %v1289
    %v1291 = vshll.u32 2475754826, %v1285
    %v1292 = vshrl.u32 2131351028, %v1286
    %v1293 = vor.u32 %v1291, %v1292
    %v1294 = vshll.u32 2131351028, %v1285
    %v1295 = vshrl.u32 2102212464, %v1286
    %v1296 = vor.u32 %v1294, %v1295
    %v1297 = vshll.u32 2102212464, %v1285
    %v1298 = vshrl.u32 920167782, %v1286
    %v1299 = vor.u32 %v1297, %v1298
    %v1300 = vshll.u32 920167782, %v1285
    %v1301 = vshrl.u32 1326507024, %v1286
    %v1302 = vor.u32 %v1300, %v1301
    %vm1303 = vcmp.lt.s32.totalorder %v1284, 1
    %vm1304 = vcmp.lt.s32.totalorder %v1284, 2
    %vm1305 = vcmp.lt.s32.totalorder %v1284, 3
    %vm1306 = vcmp.lt.s32.totalorder %v1284, 4
    %v1307 = vsel %vm1303, %v1287, %v1290
    %v1308 = vsel %vm1306, %v1296, 2102212464
    %v1309 = vsel %vm1305, %v1293, %v1308
    %v1310 = vsel %vm1304, %v1307, %v1309
    %v1311 = vsel %vm1303, %v1290, %v1293
    %v1312 = vsel %vm1306, %v1299, 920167782
    %v1313 = vsel %vm1305, %v1296, %v1312
    %v1314 = vsel %vm1304, %v1311, %v1313
    %v1315 = vsel %vm1303, %v1293, %v1296
    %v1316 = vsel %vm1306, %v1302, 1326507024
    %v1317 = vsel %vm1305, %v1299, %v1316
    %v1318 = vsel %vm1304, %v1315, %v1317
    %v1319 = vshll.u32 %v1279, 8
    %v1320 = vmul.u32.u64.compose %v1319, %v1318
    %v1321 = vextract.low.u32 %v1320
    %v1322 = vextract.high.u32 %v1320
    %v1323 = vmul.u32.u64.compose %v1319, %v1314
    %v1324 = vextract.low.u32 %v1323
    %v1325 = vextract.high.u32 %v1323
    %v1326 = vmul.u32 %v1319, %v1310
    %v1327 = vadd.s32 %v1322, %v1324
    %vm1328 = vc.u32 %v1322, %v1324
    %v1329 = vadd.s32 %v1325, 1
    %v1330 = vsel %vm1328, %v1329, %v1325
    %v1331 = vadd.s32 %v1326, %v1330
    %v1332 = vadd.s32 %v1331, 536870912
    %v1333 = vshrl.u32 %v1332, 30
    %v1334 = vshll.u32 %v1333, 30
    %v1335 = vsub.s32 %v1331, %v1334
    %vm1336 = vcmp.lt.s32.totalorder %v1335, 0
    %v1337 = vsub.s32 0, %v1335
    %v1338 = vsel %vm1336, %v1337, %v1335
    %v1339 = vclz %v1338
    %v1340 = vsub.s32 %v1339, 2
    %vm1341 = vcmp.gt.s32.totalorder 0, %v1340
    %v1342 = vsel %vm1341, 0, %v1340
    %v1343 = vsub.s32 32, %v1342
    %v1344 = vshll.u32 %v1335, %v1342
    %v1345 = vshrl.u32 %v1327, %v1343
    %v1346 = vor.u32 %v1344, %v1345
    %v1347 = vsub.s32 4294967266, %v1342
    %v1348 = vadd.s32 %v1347, 127
    %v1349 = vshll.u32 %v1348, 23
    %v1350 = vor.u32 4788187, %v1349
    %v1351 = vand.u32 2147483647, %v1350
    %v1353 = vcvt.s32.f32 %v1346
    %v1354 = vmul.f32 %v1353, %v1351
    %v1355 = vxor.u32 %v1354, 2147483648
    %v1356 = vsel %vm1273, %v1355, %v1354
    %v1357 = vsub.s32 4, %v1333
    %v1358 = vsel %vm1273, %v1357, %v1333
    %v1359 = vsel %vm1272, %v1167, %v1356
    %v1360 = vsel %vm1272, 0, %v1358
    %v1361 = vcosq.f32.pop %v1359
    %v1362 = vsinq.f32.pop %v1359
    %vm1363 = vweird.f32 %v1167
    %v1364 = vand.u32 %v1360, 3
    %vm1365 = vcmp.lt.s32.totalorder %v1364, 2
    %vm1366 = vcmp.eq.s32.totalorder %v1364, 0
    %v1367 = vxor.u32 %v1362, 2147483648
    %v1368 = vsel %vm1366, %v1361, %v1367
    %vm1369 = vcmp.eq.s32.totalorder %v1364, 2
    %v1370 = vxor.u32 %v1361, 2147483648
    %v1371 = vsel %vm1369, %v1370, %v1362
    %v1372 = vsel %vm1365, %v1368, %v1371
    %v1373 = vsel %vm1363, nan, %v1372
    %v1376 = vrot.slane %v1270, 4
    %v1377 = vrot.slane %v1373, 4
    %v1380 = vmul.f32 %v260, %v1376
    %v1381 = vmul.f32 %v260, %v1377
    %v1382 = vsub.f32 %v40, %v453
    %v1383 = vsub.f32 %v41, %v457
    %v1384 = vmul.f32 %v1380, %v1382
    %v1385 = vmul.f32 %v1381, %v1383
    %v1386 = vadd.f32 %v1156, %v1384
    %v1387 = vadd.f32 %v1157, %v1385
    %v1390 = vrot.slane %v1386, 4
    %v1391 = vrot.slane %v1387, 4
    %v1394 = vmul.f32 %v466, %v1390
    %v1395 = vmul.f32 %v467, %v1391
    %v1398 = vrot.slane %v40, 4
    %v1399 = vrot.slane %v41, 4
    %1402 = vst [vmem:[#allocation7] sm:$0xf] %v1398
    %1403 = vst [vmem:[#allocation7 + $0x8] sm:$0xf] %v1399
    %v1406 = vrot.slane %v1394, 4
    %v1407 = vrot.slane %v1395, 4
    %1410 = vst [vmem:[#allocation7] sm:$0xf0] %v1406
    %1411 = vst [vmem:[#allocation7 + $0x8] sm:$0xf0] %v1407
    %vm1416 = vcmask 1043456
    %v1417 = vrot.slane %v466, 4
    %v1418 = vrot.slane %v468, 4
    %v1419 = vsel %vm1416, %v1417, %v1418
    %v1420 = vrot.slane %v467, 4
    %v1421 = vrot.slane %v469, 4
    %v1422 = vsel %vm1416, %v1420, %v1421
    %1425 = vst [vmem:[#allocation7 + $0x10] sm:$0xff] %v1419
    %1426 = vst [vmem:[#allocation7 + $0x18] sm:$0xff] %v1422
    // Predicated region
    $region18: #{kuramoto_forward.1} parent=1 // pred_check
      _
    $region19: #{kuramoto_forward.1} parent=1 // pred_check_branch
      %1428 = sbr.rel (0) target = $region21
    $region20: #{kuramoto_forward.1} parent=1 // pred_region
      %s1430 = ssub.s32 512, 512
      %1431 = vsyncadd [#allocation4], %s1430
      %s1432 = sshll.u32 [#allocation7], 4
      %s1433 = int_to_ptr.vmem [resolvable:$true] %s1432
      %1438 = dma.vmem_to_hbm [thread:$0]  %s1433, 512, %s2, [#allocation4], 256, 256, 16
    $region21: #{kuramoto_forward.1} parent=1 // pred_fallthru
      _
    // Predicated region
    $region22: #{kuramoto_forward.1} parent=1 // pred_check
      _
    $region23: #{kuramoto_forward.1} parent=1 // pred_check_branch
      %1440 = sbr.rel (0) target = $region25
    $region24: #{kuramoto_forward.1} parent=1 // pred_region
      %1441 = dma.done [#allocation4], 512
    $region25: #{kuramoto_forward.1} parent=1 // pred_fallthru
      _
    %1442 = vsyncpa [#allocation3], 1
    %1443 = vsyncpa [#allocation6], 1
    %1444 = vsyncpa [#allocation4], 1

</llo_original>
